<compile_context>
chip_gen: v6e
topology: v6e:2x2x1
jax: 0.10.0
libtpu: 0.0.40
codegen_flags: <defaults>
</compile_context>

<pallas_src>
import math

import jax
import jax.numpy as jnp
from jax.experimental import pallas as pl
from jax.experimental.pallas import tpu as pltpu


# --------------------------- fused kernel -----------------------------------
def dec_att_kernel(lens_ref, x_ref, enc_ref, wih_ref, whh_ref, b_ref,
                   w1_ref, w2_ref, blin_ref, out_ref):
    # lens_ref : (B, 1)  int32  decoder-side lengths for the encoder mask
    # x_ref    : (B, Td, H)     embeddings
    # enc_ref  : (B, Te, H)     encoder outputs
    # wih_ref  : (H, 4H)        W_ih^T, gate columns in PyTorch order i, f, g, o
    # whh_ref  : (H, 4H)        W_hh^T
    # b_ref    : (1, 4H)        b_ih + b_hh
    # w1_ref   : (H, H)         Linear weight for the dec_output half
    # w2_ref   : (H, H)         Linear weight for the attn half
    # blin_ref : (1, H)         Linear bias
    B, T_dec, H = x_ref.shape
    _, T_enc, _ = enc_ref.shape

    # ---- LSTM input projection: ONE lane-full matmul for all gates/timesteps ----
    x2 = x_ref[...].reshape(B * T_dec, H)                            # (B*Td, H)
    xp = jnp.dot(x2, wih_ref[...],
                 preferred_element_type=jnp.float32) + b_ref[...]    # (B*Td, 4H)
    xp = xp.reshape(B, T_dec, 4 * H)                                 # (B, Td, 4H)

    whh = whh_ref[...]                                               # (H, 4H)

    # ---- recurrence, fully unrolled; ONE (B,H)@(H,4H) matmul per step ----
    h = jnp.zeros((B, H), jnp.float32)
    c = jnp.zeros((B, H), jnp.float32)
    hs = []
    for t in range(T_dec):
        gates = xp[:, t, :] + jnp.dot(h, whh,
                                      preferred_element_type=jnp.float32)  # (B, 4H)
        sig = jax.nn.sigmoid(gates)             # one EUP pass covers i, f, o
        i_g = sig[:, 0:H]
        f_g = sig[:, H:2 * H]
        o_g = sig[:, 3 * H:4 * H]
        g_g = jnp.tanh(gates[:, 2 * H:3 * H])   # tanh only for the g gate
        c = f_g * c + i_g * g_g
        h = o_g * jnp.tanh(c)
        hs.append(h)

    # dec_output never touches VMEM scratch: single stack, no masked sub-tile stores.
    dec = jnp.stack(hs, axis=1)                                      # (B, Td, H)
    enc = enc_ref[...]                                               # (B, Te, H)

    # ---- attention: scores = dec @ enc^T (batched, no explicit transpose) ----
    scores = jax.lax.dot_general(
        dec, enc,
        dimension_numbers=(((2,), (2,)), ((0,), (0,))),
        preferred_element_type=jnp.float32)                          # (B, Td, Te)

    # vectorized length mask: one broadcasted compare/select
    lens = lens_ref[...]                                             # (B, 1) int32
    pos = jax.lax.broadcasted_iota(jnp.int32, (B, 1, T_enc), 2)
    mask = jnp.where(pos < lens[:, :, None], 0.0, -1000000000.0)     # (B, 1, Te)
    scores = scores + mask

    # softmax over the encoder axis (dim=2 in torch); exact normalization
    m = jnp.max(scores, axis=-1, keepdims=True)
    e = jnp.exp(scores - m)
    denom = jnp.sum(e, axis=-1, keepdims=True)
    dist = e / denom                                                 # (B, Td, Te)

    # attn = dist @ enc  (== bmm(enc^T, dist^T)^T)
    attn = jax.lax.dot_general(
        dist, enc,
        dimension_numbers=(((2,), (1,)), ((0,), (0,))),
        preferred_element_type=jnp.float32)                          # (B, Td, H)

    # ---- Linear on [dec, attn] without the concat: dec @ W1 + attn @ W2 + b ----
    dec2 = dec.reshape(B * T_dec, H)
    attn2 = attn.reshape(B * T_dec, H)
    out2 = (jnp.dot(dec2, w1_ref[...], preferred_element_type=jnp.float32)
            + jnp.dot(attn2, w2_ref[...], preferred_element_type=jnp.float32)
            + blin_ref[...])                                         # (B*Td, H)
    out_ref[...] = out2.reshape(B, T_dec, H).astype(out_ref.dtype)


# -------------------- one-time parameter re-layout ---------------------------
def prepare_dec_att_params(params):
    """Hoisted out of the per-call path: do the slice/transpose/stack once."""
    H4, H = params["w_ih"].shape                 # (4H, H)
    wih = jnp.asarray(params["w_ih"].T, jnp.float32)                  # (H, 4H)
    whh = jnp.asarray(params["w_hh"].T, jnp.float32)                  # (H, 4H)
    b = jnp.asarray((params["b_ih"] + params["b_hh"]).reshape(1, H4),
                    jnp.float32)                                      # (1, 4H)
    w_lin = params["w_lin"]                      # (H, 2H)
    w1 = jnp.asarray(w_lin[:, :H].T, jnp.float32)                     # (H, H)
    w2 = jnp.asarray(w_lin[:, H:].T, jnp.float32)                     # (H, H)
    blin = jnp.asarray(params["b_lin"].reshape(1, H), jnp.float32)    # (1, H)
    return {"wih": wih, "whh": whh, "b": b, "w1": w1, "w2": w2, "blin": blin}


# ------------------------------- wrapper ------------------------------------
def dec_att_layer_train(embs, enc_output, de_lens, prepared, max_len=60):
    B, T_dec, H = embs.shape
    _, T_enc, _ = enc_output.shape
    assert T_enc == max_len, "module hard-codes mask length (max_len) = T_enc"

    lens2 = de_lens.reshape(B, 1).astype(jnp.int32)

    out = pl.pallas_call(
        dec_att_kernel,
        out_shape=jax.ShapeDtypeStruct((B, T_dec, H), jnp.float32),
        grid_spec=pltpu.PrefetchScalarGridSpec(
            num_scalar_prefetch=0,
            grid=(1,),
            in_specs=[
                pl.BlockSpec((B, 1), lambda i: (0, 0)),               # de_lens
                pl.BlockSpec((B, T_dec, H), lambda i: (0, 0, 0)),     # embs
                pl.BlockSpec((B, T_enc, H), lambda i: (0, 0, 0)),     # enc_output
                pl.BlockSpec((H, 4 * H), lambda i: (0, 0)),           # W_ih^T
                pl.BlockSpec((H, 4 * H), lambda i: (0, 0)),           # W_hh^T
                pl.BlockSpec((1, 4 * H), lambda i: (0, 0)),           # bias
                pl.BlockSpec((H, H), lambda i: (0, 0)),               # W1
                pl.BlockSpec((H, H), lambda i: (0, 0)),               # W2
                pl.BlockSpec((1, H), lambda i: (0, 0)),               # b_lin
            ],
            out_specs=pl.BlockSpec((B, T_dec, H), lambda i: (0, 0, 0)),
        ),
        compiler_params=pltpu.CompilerParams(
            dimension_semantics=("arbitrary",)),   # single step; serial recurrence inside
    )(lens2, embs.astype(jnp.float32), enc_output.astype(jnp.float32),
      prepared["wih"], prepared["whh"], prepared["b"],
      prepared["w1"], prepared["w2"], prepared["blin"])

    return out


# ------------------------------- main ----------------------------------------
if __name__ == "__main__":
    B, T_dec, T_enc, H = 2, 8, 60, 32     # T_enc = 60 is forced by create_mask
    key = jax.random.PRNGKey(0)
    ks = jax.random.split(key, 9)
    bound = 1.0 / math.sqrt(H)            # PyTorch default uniform init bound

    def u(k, shape):
        return jax.random.uniform(k, shape, jnp.float32, -bound, bound)

    params = {
        "w_ih": u(ks[0], (4 * H, H)),     # LSTM weight_ih_l0
        "w_hh": u(ks[1], (4 * H, H)),     # LSTM weight_hh_l0
        "b_ih": u(ks[2], (4 * H,)),
        "b_hh": u(ks[3], (4 * H,)),
        "w_lin": u(ks[4], (H, 2 * H)),    # Linear(hidden*2 -> hidden)
        "b_lin": u(ks[5], (H,)),
    }

    embs = jax.random.normal(ks[6], (B, T_dec, H), jnp.float32)
    enc_output = jax.random.normal(ks[7], (B, T_enc, H), jnp.float32)
    de_lens = jnp.array([45, 12], dtype=jnp.int32)

    prepared = prepare_dec_att_params(params)     # one-time weight re-layout
    out = dec_att_layer_train(embs, enc_output, de_lens, prepared)
    jax.block_until_ready(out)
    assert out.shape == (B, T_dec, H) and out.dtype == jnp.float32
    print("KERNEL_OK")
</pallas_src>

<mosaic_0001>
module attributes {stable_mosaic.version = 11 : i64} {
  func.func @dec_att_kernel(%arg0: i32, %arg1: memref<2x1xi32, #tpu.memory_space<vmem>>, %arg2: memref<2x8x32xf32, #tpu.memory_space<vmem>>, %arg3: memref<2x60x32xf32, #tpu.memory_space<vmem>>, %arg4: memref<32x128xf32, #tpu.memory_space<vmem>>, %arg5: memref<32x128xf32, #tpu.memory_space<vmem>>, %arg6: memref<1x128xf32, #tpu.memory_space<vmem>>, %arg7: memref<32x32xf32, #tpu.memory_space<vmem>>, %arg8: memref<32x32xf32, #tpu.memory_space<vmem>>, %arg9: memref<1x32xf32, #tpu.memory_space<vmem>>, %arg10: memref<2x8x32xf32, #tpu.memory_space<vmem>>) attributes {dimension_semantics = [#tpu.dimension_semantics<arbitrary>], iteration_bounds = array<i64: 1>, scalar_prefetch = 0 : i64, scratch_operands = 0 : i64, tpu.core_type = #tpu.core_type<tc>, window_params = [{pipeline_mode = #tpu.pipeline_mode<synchronous>, transform_indices = @transform_0, window_bounds = array<i64: 2, 1>}, {pipeline_mode = #tpu.pipeline_mode<synchronous>, transform_indices = @transform_1, window_bounds = array<i64: 2, 8, 32>}, {pipeline_mode = #tpu.pipeline_mode<synchronous>, transform_indices = @transform_2, window_bounds = array<i64: 2, 60, 32>}, {pipeline_mode = #tpu.pipeline_mode<synchronous>, transform_indices = @transform_3, window_bounds = array<i64: 32, 128>}, {pipeline_mode = #tpu.pipeline_mode<synchronous>, transform_indices = @transform_4, window_bounds = array<i64: 32, 128>}, {pipeline_mode = #tpu.pipeline_mode<synchronous>, transform_indices = @transform_5, window_bounds = array<i64: 1, 128>}, {pipeline_mode = #tpu.pipeline_mode<synchronous>, transform_indices = @transform_6, window_bounds = array<i64: 32, 32>}, {pipeline_mode = #tpu.pipeline_mode<synchronous>, transform_indices = @transform_7, window_bounds = array<i64: 32, 32>}, {pipeline_mode = #tpu.pipeline_mode<synchronous>, transform_indices = @transform_8, window_bounds = array<i64: 1, 32>}, {pipeline_mode = #tpu.pipeline_mode<synchronous>, transform_indices = @transform_9, window_bounds = array<i64: 2, 8, 32>}]} {
    %c0 = arith.constant 0 : index
    %c0_0 = arith.constant 0 : index
    %c0_1 = arith.constant 0 : index
    %0 = vector.load %arg2[%c0, %c0_0, %c0_1] : memref<2x8x32xf32, #tpu.memory_space<vmem>>, vector<2x8x32xf32>
    %1 = vector.shape_cast %0 : vector<2x8x32xf32> to vector<16x32xf32>
    %c0_2 = arith.constant 0 : index
    %c0_3 = arith.constant 0 : index
    %2 = vector.load %arg4[%c0_2, %c0_3] : memref<32x128xf32, #tpu.memory_space<vmem>>, vector<32x128xf32>
    %cst = arith.constant dense<0.000000e+00> : vector<16x128xf32>
    %3 = tpu.matmul %1, %2, %cst {dimension_numbers = #tpu.dot_dimension_numbers<[1], [0], [0], [1], [0, 0, 1, 1], [], []>} : vector<16x32xf32>, vector<32x128xf32>, vector<16x128xf32> -> vector<16x128xf32>
    %c0_4 = arith.constant 0 : index
    %c0_5 = arith.constant 0 : index
    %4 = vector.load %arg6[%c0_4, %c0_5] : memref<1x128xf32, #tpu.memory_space<vmem>>, vector<1x128xf32>
    %5 = vector.broadcast %4 : vector<1x128xf32> to vector<16x128xf32>
    %6 = arith.addf %3, %5 : vector<16x128xf32>
    %7 = vector.shape_cast %6 : vector<16x128xf32> to vector<2x8x128xf32>
    %c0_6 = arith.constant 0 : index
    %c0_7 = arith.constant 0 : index
    %8 = vector.load %arg5[%c0_6, %c0_7] : memref<32x128xf32, #tpu.memory_space<vmem>>, vector<32x128xf32>
    %cst_8 = arith.constant 0.000000e+00 : f32
    %9 = vector.broadcast %cst_8 : f32 to vector<2x32xf32>
    %cst_9 = arith.constant 0.000000e+00 : f32
    %10 = vector.broadcast %cst_9 : f32 to vector<2x32xf32>
    %11 = vector.extract_strided_slice %7 {offsets = [0, 0, 0], sizes = [2, 1, 128], strides = [1, 1, 1]} : vector<2x8x128xf32> to vector<2x1x128xf32>
    %12 = vector.shape_cast %11 : vector<2x1x128xf32> to vector<2x128xf32>
    %cst_10 = arith.constant dense<0.000000e+00> : vector<2x128xf32>
    %13 = tpu.matmul %9, %8, %cst_10 {dimension_numbers = #tpu.dot_dimension_numbers<[1], [0], [0], [1], [0, 0, 1, 1], [], []>} : vector<2x32xf32>, vector<32x128xf32>, vector<2x128xf32> -> vector<2x128xf32>
    %14 = arith.addf %12, %13 : vector<2x128xf32>
    %15 = arith.negf %14 : vector<2x128xf32>
    %16 = math.exp %15 : vector<2x128xf32>
    %cst_11 = arith.constant 1.000000e+00 : f32
    %17 = vector.broadcast %cst_11 : f32 to vector<2x128xf32>
    %18 = arith.addf %17, %16 : vector<2x128xf32>
    %19 = arith.divf %17, %18 : vector<2x128xf32>
    %20 = vector.extract_strided_slice %19 {offsets = [0, 0], sizes = [2, 32], strides = [1, 1]} : vector<2x128xf32> to vector<2x32xf32>
    %21 = vector.extract_strided_slice %19 {offsets = [0, 32], sizes = [2, 32], strides = [1, 1]} : vector<2x128xf32> to vector<2x32xf32>
    %22 = vector.extract_strided_slice %19 {offsets = [0, 96], sizes = [2, 32], strides = [1, 1]} : vector<2x128xf32> to vector<2x32xf32>
    %23 = vector.extract_strided_slice %14 {offsets = [0, 64], sizes = [2, 32], strides = [1, 1]} : vector<2x128xf32> to vector<2x32xf32>
    %24 = math.tanh %23 : vector<2x32xf32>
    %25 = arith.mulf %21, %10 : vector<2x32xf32>
    %26 = arith.mulf %20, %24 : vector<2x32xf32>
    %27 = arith.addf %25, %26 : vector<2x32xf32>
    %28 = math.tanh %27 : vector<2x32xf32>
    %29 = arith.mulf %22, %28 : vector<2x32xf32>
    %30 = vector.extract_strided_slice %7 {offsets = [0, 1, 0], sizes = [2, 1, 128], strides = [1, 1, 1]} : vector<2x8x128xf32> to vector<2x1x128xf32>
    %31 = vector.shape_cast %30 : vector<2x1x128xf32> to vector<2x128xf32>
    %cst_12 = arith.constant dense<0.000000e+00> : vector<2x128xf32>
    %32 = tpu.matmul %29, %8, %cst_12 {dimension_numbers = #tpu.dot_dimension_numbers<[1], [0], [0], [1], [0, 0, 1, 1], [], []>} : vector<2x32xf32>, vector<32x128xf32>, vector<2x128xf32> -> vector<2x128xf32>
    %33 = arith.addf %31, %32 : vector<2x128xf32>
    %34 = arith.negf %33 : vector<2x128xf32>
    %35 = math.exp %34 : vector<2x128xf32>
    %cst_13 = arith.constant 1.000000e+00 : f32
    %36 = vector.broadcast %cst_13 : f32 to vector<2x128xf32>
    %37 = arith.addf %36, %35 : vector<2x128xf32>
    %38 = arith.divf %36, %37 : vector<2x128xf32>
    %39 = vector.extract_strided_slice %38 {offsets = [0, 0], sizes = [2, 32], strides = [1, 1]} : vector<2x128xf32> to vector<2x32xf32>
    %40 = vector.extract_strided_slice %38 {offsets = [0, 32], sizes = [2, 32], strides = [1, 1]} : vector<2x128xf32> to vector<2x32xf32>
    %41 = vector.extract_strided_slice %38 {offsets = [0, 96], sizes = [2, 32], strides = [1, 1]} : vector<2x128xf32> to vector<2x32xf32>
    %42 = vector.extract_strided_slice %33 {offsets = [0, 64], sizes = [2, 32], strides = [1, 1]} : vector<2x128xf32> to vector<2x32xf32>
    %43 = math.tanh %42 : vector<2x32xf32>
    %44 = arith.mulf %40, %27 : vector<2x32xf32>
    %45 = arith.mulf %39, %43 : vector<2x32xf32>
    %46 = arith.addf %44, %45 : vector<2x32xf32>
    %47 = math.tanh %46 : vector<2x32xf32>
    %48 = arith.mulf %41, %47 : vector<2x32xf32>
    %49 = vector.extract_strided_slice %7 {offsets = [0, 2, 0], sizes = [2, 1, 128], strides = [1, 1, 1]} : vector<2x8x128xf32> to vector<2x1x128xf32>
    %50 = vector.shape_cast %49 : vector<2x1x128xf32> to vector<2x128xf32>
    %cst_14 = arith.constant dense<0.000000e+00> : vector<2x128xf32>
    %51 = tpu.matmul %48, %8, %cst_14 {dimension_numbers = #tpu.dot_dimension_numbers<[1], [0], [0], [1], [0, 0, 1, 1], [], []>} : vector<2x32xf32>, vector<32x128xf32>, vector<2x128xf32> -> vector<2x128xf32>
    %52 = arith.addf %50, %51 : vector<2x128xf32>
    %53 = arith.negf %52 : vector<2x128xf32>
    %54 = math.exp %53 : vector<2x128xf32>
    %cst_15 = arith.constant 1.000000e+00 : f32
    %55 = vector.broadcast %cst_15 : f32 to vector<2x128xf32>
    %56 = arith.addf %55, %54 : vector<2x128xf32>
    %57 = arith.divf %55, %56 : vector<2x128xf32>
    %58 = vector.extract_strided_slice %57 {offsets = [0, 0], sizes = [2, 32], strides = [1, 1]} : vector<2x128xf32> to vector<2x32xf32>
    %59 = vector.extract_strided_slice %57 {offsets = [0, 32], sizes = [2, 32], strides = [1, 1]} : vector<2x128xf32> to vector<2x32xf32>
    %60 = vector.extract_strided_slice %57 {offsets = [0, 96], sizes = [2, 32], strides = [1, 1]} : vector<2x128xf32> to vector<2x32xf32>
    %61 = vector.extract_strided_slice %52 {offsets = [0, 64], sizes = [2, 32], strides = [1, 1]} : vector<2x128xf32> to vector<2x32xf32>
    %62 = math.tanh %61 : vector<2x32xf32>
    %63 = arith.mulf %59, %46 : vector<2x32xf32>
    %64 = arith.mulf %58, %62 : vector<2x32xf32>
    %65 = arith.addf %63, %64 : vector<2x32xf32>
    %66 = math.tanh %65 : vector<2x32xf32>
    %67 = arith.mulf %60, %66 : vector<2x32xf32>
    %68 = vector.extract_strided_slice %7 {offsets = [0, 3, 0], sizes = [2, 1, 128], strides = [1, 1, 1]} : vector<2x8x128xf32> to vector<2x1x128xf32>
    %69 = vector.shape_cast %68 : vector<2x1x128xf32> to vector<2x128xf32>
    %cst_16 = arith.constant dense<0.000000e+00> : vector<2x128xf32>
    %70 = tpu.matmul %67, %8, %cst_16 {dimension_numbers = #tpu.dot_dimension_numbers<[1], [0], [0], [1], [0, 0, 1, 1], [], []>} : vector<2x32xf32>, vector<32x128xf32>, vector<2x128xf32> -> vector<2x128xf32>
    %71 = arith.addf %69, %70 : vector<2x128xf32>
    %72 = arith.negf %71 : vector<2x128xf32>
    %73 = math.exp %72 : vector<2x128xf32>
    %cst_17 = arith.constant 1.000000e+00 : f32
    %74 = vector.broadcast %cst_17 : f32 to vector<2x128xf32>
    %75 = arith.addf %74, %73 : vector<2x128xf32>
    %76 = arith.divf %74, %75 : vector<2x128xf32>
    %77 = vector.extract_strided_slice %76 {offsets = [0, 0], sizes = [2, 32], strides = [1, 1]} : vector<2x128xf32> to vector<2x32xf32>
    %78 = vector.extract_strided_slice %76 {offsets = [0, 32], sizes = [2, 32], strides = [1, 1]} : vector<2x128xf32> to vector<2x32xf32>
    %79 = vector.extract_strided_slice %76 {offsets = [0, 96], sizes = [2, 32], strides = [1, 1]} : vector<2x128xf32> to vector<2x32xf32>
    %80 = vector.extract_strided_slice %71 {offsets = [0, 64], sizes = [2, 32], strides = [1, 1]} : vector<2x128xf32> to vector<2x32xf32>
    %81 = math.tanh %80 : vector<2x32xf32>
    %82 = arith.mulf %78, %65 : vector<2x32xf32>
    %83 = arith.mulf %77, %81 : vector<2x32xf32>
    %84 = arith.addf %82, %83 : vector<2x32xf32>
    %85 = math.tanh %84 : vector<2x32xf32>
    %86 = arith.mulf %79, %85 : vector<2x32xf32>
    %87 = vector.extract_strided_slice %7 {offsets = [0, 4, 0], sizes = [2, 1, 128], strides = [1, 1, 1]} : vector<2x8x128xf32> to vector<2x1x128xf32>
    %88 = vector.shape_cast %87 : vector<2x1x128xf32> to vector<2x128xf32>
    %cst_18 = arith.constant dense<0.000000e+00> : vector<2x128xf32>
    %89 = tpu.matmul %86, %8, %cst_18 {dimension_numbers = #tpu.dot_dimension_numbers<[1], [0], [0], [1], [0, 0, 1, 1], [], []>} : vector<2x32xf32>, vector<32x128xf32>, vector<2x128xf32> -> vector<2x128xf32>
    %90 = arith.addf %88, %89 : vector<2x128xf32>
    %91 = arith.negf %90 : vector<2x128xf32>
    %92 = math.exp %91 : vector<2x128xf32>
    %cst_19 = arith.constant 1.000000e+00 : f32
    %93 = vector.broadcast %cst_19 : f32 to vector<2x128xf32>
    %94 = arith.addf %93, %92 : vector<2x128xf32>
    %95 = arith.divf %93, %94 : vector<2x128xf32>
    %96 = vector.extract_strided_slice %95 {offsets = [0, 0], sizes = [2, 32], strides = [1, 1]} : vector<2x128xf32> to vector<2x32xf32>
    %97 = vector.extract_strided_slice %95 {offsets = [0, 32], sizes = [2, 32], strides = [1, 1]} : vector<2x128xf32> to vector<2x32xf32>
    %98 = vector.extract_strided_slice %95 {offsets = [0, 96], sizes = [2, 32], strides = [1, 1]} : vector<2x128xf32> to vector<2x32xf32>
    %99 = vector.extract_strided_slice %90 {offsets = [0, 64], sizes = [2, 32], strides = [1, 1]} : vector<2x128xf32> to vector<2x32xf32>
    %100 = math.tanh %99 : vector<2x32xf32>
    %101 = arith.mulf %97, %84 : vector<2x32xf32>
    %102 = arith.mulf %96, %100 : vector<2x32xf32>
    %103 = arith.addf %101, %102 : vector<2x32xf32>
    %104 = math.tanh %103 : vector<2x32xf32>
    %105 = arith.mulf %98, %104 : vector<2x32xf32>
    %106 = vector.extract_strided_slice %7 {offsets = [0, 5, 0], sizes = [2, 1, 128], strides = [1, 1, 1]} : vector<2x8x128xf32> to vector<2x1x128xf32>
    %107 = vector.shape_cast %106 : vector<2x1x128xf32> to vector<2x128xf32>
    %cst_20 = arith.constant dense<0.000000e+00> : vector<2x128xf32>
    %108 = tpu.matmul %105, %8, %cst_20 {dimension_numbers = #tpu.dot_dimension_numbers<[1], [0], [0], [1], [0, 0, 1, 1], [], []>} : vector<2x32xf32>, vector<32x128xf32>, vector<2x128xf32> -> vector<2x128xf32>
    %109 = arith.addf %107, %108 : vector<2x128xf32>
    %110 = arith.negf %109 : vector<2x128xf32>
    %111 = math.exp %110 : vector<2x128xf32>
    %cst_21 = arith.constant 1.000000e+00 : f32
    %112 = vector.broadcast %cst_21 : f32 to vector<2x128xf32>
    %113 = arith.addf %112, %111 : vector<2x128xf32>
    %114 = arith.divf %112, %113 : vector<2x128xf32>
    %115 = vector.extract_strided_slice %114 {offsets = [0, 0], sizes = [2, 32], strides = [1, 1]} : vector<2x128xf32> to vector<2x32xf32>
    %116 = vector.extract_strided_slice %114 {offsets = [0, 32], sizes = [2, 32], strides = [1, 1]} : vector<2x128xf32> to vector<2x32xf32>
    %117 = vector.extract_strided_slice %114 {offsets = [0, 96], sizes = [2, 32], strides = [1, 1]} : vector<2x128xf32> to vector<2x32xf32>
    %118 = vector.extract_strided_slice %109 {offsets = [0, 64], sizes = [2, 32], strides = [1, 1]} : vector<2x128xf32> to vector<2x32xf32>
    %119 = math.tanh %118 : vector<2x32xf32>
    %120 = arith.mulf %116, %103 : vector<2x32xf32>
    %121 = arith.mulf %115, %119 : vector<2x32xf32>
    %122 = arith.addf %120, %121 : vector<2x32xf32>
    %123 = math.tanh %122 : vector<2x32xf32>
    %124 = arith.mulf %117, %123 : vector<2x32xf32>
    %125 = vector.extract_strided_slice %7 {offsets = [0, 6, 0], sizes = [2, 1, 128], strides = [1, 1, 1]} : vector<2x8x128xf32> to vector<2x1x128xf32>
    %126 = vector.shape_cast %125 : vector<2x1x128xf32> to vector<2x128xf32>
    %cst_22 = arith.constant dense<0.000000e+00> : vector<2x128xf32>
    %127 = tpu.matmul %124, %8, %cst_22 {dimension_numbers = #tpu.dot_dimension_numbers<[1], [0], [0], [1], [0, 0, 1, 1], [], []>} : vector<2x32xf32>, vector<32x128xf32>, vector<2x128xf32> -> vector<2x128xf32>
    %128 = arith.addf %126, %127 : vector<2x128xf32>
    %129 = arith.negf %128 : vector<2x128xf32>
    %130 = math.exp %129 : vector<2x128xf32>
    %cst_23 = arith.constant 1.000000e+00 : f32
    %131 = vector.broadcast %cst_23 : f32 to vector<2x128xf32>
    %132 = arith.addf %131, %130 : vector<2x128xf32>
    %133 = arith.divf %131, %132 : vector<2x128xf32>
    %134 = vector.extract_strided_slice %133 {offsets = [0, 0], sizes = [2, 32], strides = [1, 1]} : vector<2x128xf32> to vector<2x32xf32>
    %135 = vector.extract_strided_slice %133 {offsets = [0, 32], sizes = [2, 32], strides = [1, 1]} : vector<2x128xf32> to vector<2x32xf32>
    %136 = vector.extract_strided_slice %133 {offsets = [0, 96], sizes = [2, 32], strides = [1, 1]} : vector<2x128xf32> to vector<2x32xf32>
    %137 = vector.extract_strided_slice %128 {offsets = [0, 64], sizes = [2, 32], strides = [1, 1]} : vector<2x128xf32> to vector<2x32xf32>
    %138 = math.tanh %137 : vector<2x32xf32>
    %139 = arith.mulf %135, %122 : vector<2x32xf32>
    %140 = arith.mulf %134, %138 : vector<2x32xf32>
    %141 = arith.addf %139, %140 : vector<2x32xf32>
    %142 = math.tanh %141 : vector<2x32xf32>
    %143 = arith.mulf %136, %142 : vector<2x32xf32>
    %144 = vector.extract_strided_slice %7 {offsets = [0, 7, 0], sizes = [2, 1, 128], strides = [1, 1, 1]} : vector<2x8x128xf32> to vector<2x1x128xf32>
    %145 = vector.shape_cast %144 : vector<2x1x128xf32> to vector<2x128xf32>
    %cst_24 = arith.constant dense<0.000000e+00> : vector<2x128xf32>
    %146 = tpu.matmul %143, %8, %cst_24 {dimension_numbers = #tpu.dot_dimension_numbers<[1], [0], [0], [1], [0, 0, 1, 1], [], []>} : vector<2x32xf32>, vector<32x128xf32>, vector<2x128xf32> -> vector<2x128xf32>
    %147 = arith.addf %145, %146 : vector<2x128xf32>
    %148 = arith.negf %147 : vector<2x128xf32>
    %149 = math.exp %148 : vector<2x128xf32>
    %cst_25 = arith.constant 1.000000e+00 : f32
    %150 = vector.broadcast %cst_25 : f32 to vector<2x128xf32>
    %151 = arith.addf %150, %149 : vector<2x128xf32>
    %152 = arith.divf %150, %151 : vector<2x128xf32>
    %153 = vector.extract_strided_slice %152 {offsets = [0, 0], sizes = [2, 32], strides = [1, 1]} : vector<2x128xf32> to vector<2x32xf32>
    %154 = vector.extract_strided_slice %152 {offsets = [0, 32], sizes = [2, 32], strides = [1, 1]} : vector<2x128xf32> to vector<2x32xf32>
    %155 = vector.extract_strided_slice %152 {offsets = [0, 96], sizes = [2, 32], strides = [1, 1]} : vector<2x128xf32> to vector<2x32xf32>
    %156 = vector.extract_strided_slice %147 {offsets = [0, 64], sizes = [2, 32], strides = [1, 1]} : vector<2x128xf32> to vector<2x32xf32>
    %157 = math.tanh %156 : vector<2x32xf32>
    %158 = arith.mulf %154, %141 : vector<2x32xf32>
    %159 = arith.mulf %153, %157 : vector<2x32xf32>
    %160 = arith.addf %158, %159 : vector<2x32xf32>
    %161 = math.tanh %160 : vector<2x32xf32>
    %162 = arith.mulf %155, %161 : vector<2x32xf32>
    %163 = vector.shape_cast %29 : vector<2x32xf32> to vector<2x1x32xf32>
    %164 = vector.shape_cast %48 : vector<2x32xf32> to vector<2x1x32xf32>
    %165 = vector.shape_cast %67 : vector<2x32xf32> to vector<2x1x32xf32>
    %166 = vector.shape_cast %86 : vector<2x32xf32> to vector<2x1x32xf32>
    %167 = vector.shape_cast %105 : vector<2x32xf32> to vector<2x1x32xf32>
    %168 = vector.shape_cast %124 : vector<2x32xf32> to vector<2x1x32xf32>
    %169 = vector.shape_cast %143 : vector<2x32xf32> to vector<2x1x32xf32>
    %170 = vector.shape_cast %162 : vector<2x32xf32> to vector<2x1x32xf32>
    %171 = tpu.concatenate %163, %164, %165, %166, %167, %168, %169, %170 in 1 : vector<2x1x32xf32>, vector<2x1x32xf32>, vector<2x1x32xf32>, vector<2x1x32xf32>, vector<2x1x32xf32>, vector<2x1x32xf32>, vector<2x1x32xf32>, vector<2x1x32xf32> -> vector<2x8x32xf32>
    %c0_26 = arith.constant 0 : index
    %c0_27 = arith.constant 0 : index
    %c0_28 = arith.constant 0 : index
    %172 = vector.load %arg3[%c0_26, %c0_27, %c0_28] : memref<2x60x32xf32, #tpu.memory_space<vmem>>, vector<2x60x32xf32>
    %cst_29 = arith.constant dense<0.000000e+00> : vector<2x8x60xf32>
    %173 = tpu.matmul %171, %172, %cst_29 {dimension_numbers = #tpu.dot_dimension_numbers<[2], [2], [1], [1], [0, 0, 0, 1, 1, 1], [0], [0]>} : vector<2x8x32xf32>, vector<2x60x32xf32>, vector<2x8x60xf32> -> vector<2x8x60xf32>
    %c0_30 = arith.constant 0 : index
    %c0_31 = arith.constant 0 : index
    %174 = vector.load %arg1[%c0_30, %c0_31] : memref<2x1xi32, #tpu.memory_space<vmem>>, vector<2x1xi32>
    %175 = tpu.iota {dimensions = array<i32: 2>} : vector<2x1x60xi32>
    %176 = vector.shape_cast %174 : vector<2x1xi32> to vector<2x1x1xi32>
    %177 = vector.broadcast %176 : vector<2x1x1xi32> to vector<2x1x60xi32>
    %178 = arith.cmpi slt, %175, %177 : vector<2x1x60xi32>
    %cst_32 = arith.constant 0.000000e+00 : f32
    %cst_33 = arith.constant -1.000000e+09 : f32
    %179 = vector.broadcast %cst_32 : f32 to vector<2x1x60xf32>
    %180 = vector.broadcast %cst_33 : f32 to vector<2x1x60xf32>
    %181 = arith.select %178, %179, %180 : vector<2x1x60xi1>, vector<2x1x60xf32>
    %182 = vector.broadcast %181 : vector<2x1x60xf32> to vector<2x8x60xf32>
    %183 = arith.addf %173, %182 : vector<2x8x60xf32>
    %cst_34 = arith.constant dense<0xFF800000> : vector<2x8xf32>
    %184 = vector.multi_reduction <maximumf>, %183, %cst_34 [2] : vector<2x8x60xf32> to vector<2x8xf32>
    %185 = vector.shape_cast %184 : vector<2x8xf32> to vector<2x8x1xf32>
    %186 = vector.broadcast %185 : vector<2x8x1xf32> to vector<2x8x60xf32>
    %187 = arith.subf %183, %186 : vector<2x8x60xf32>
    %188 = math.exp %187 : vector<2x8x60xf32>
    %cst_35 = arith.constant dense<0.000000e+00> : vector<2x8xf32>
    %189 = vector.multi_reduction <add>, %188, %cst_35 [2] : vector<2x8x60xf32> to vector<2x8xf32>
    %190 = vector.shape_cast %189 : vector<2x8xf32> to vector<2x8x1xf32>
    %191 = vector.broadcast %190 : vector<2x8x1xf32> to vector<2x8x60xf32>
    %192 = arith.divf %188, %191 : vector<2x8x60xf32>
    %cst_36 = arith.constant dense<0.000000e+00> : vector<2x8x32xf32>
    %193 = tpu.matmul %192, %172, %cst_36 {dimension_numbers = #tpu.dot_dimension_numbers<[2], [1], [1], [2], [0, 0, 0, 1, 1, 2], [0], [0]>} : vector<2x8x60xf32>, vector<2x60x32xf32>, vector<2x8x32xf32> -> vector<2x8x32xf32>
    %194 = vector.shape_cast %171 : vector<2x8x32xf32> to vector<16x32xf32>
    %195 = vector.shape_cast %193 : vector<2x8x32xf32> to vector<16x32xf32>
    %c0_37 = arith.constant 0 : index
    %c0_38 = arith.constant 0 : index
    %196 = vector.load %arg7[%c0_37, %c0_38] : memref<32x32xf32, #tpu.memory_space<vmem>>, vector<32x32xf32>
    %cst_39 = arith.constant dense<0.000000e+00> : vector<16x32xf32>
    %197 = tpu.matmul %194, %196, %cst_39 {dimension_numbers = #tpu.dot_dimension_numbers<[1], [0], [0], [1], [0, 0, 1, 1], [], []>} : vector<16x32xf32>, vector<32x32xf32>, vector<16x32xf32> -> vector<16x32xf32>
    %c0_40 = arith.constant 0 : index
    %c0_41 = arith.constant 0 : index
    %198 = vector.load %arg8[%c0_40, %c0_41] : memref<32x32xf32, #tpu.memory_space<vmem>>, vector<32x32xf32>
    %cst_42 = arith.constant dense<0.000000e+00> : vector<16x32xf32>
    %199 = tpu.matmul %195, %198, %cst_42 {dimension_numbers = #tpu.dot_dimension_numbers<[1], [0], [0], [1], [0, 0, 1, 1], [], []>} : vector<16x32xf32>, vector<32x32xf32>, vector<16x32xf32> -> vector<16x32xf32>
    %200 = arith.addf %197, %199 : vector<16x32xf32>
    %c0_43 = arith.constant 0 : index
    %c0_44 = arith.constant 0 : index
    %201 = vector.load %arg9[%c0_43, %c0_44] : memref<1x32xf32, #tpu.memory_space<vmem>>, vector<1x32xf32>
    %202 = vector.broadcast %201 : vector<1x32xf32> to vector<16x32xf32>
    %203 = arith.addf %200, %202 : vector<16x32xf32>
    %204 = vector.shape_cast %203 : vector<16x32xf32> to vector<2x8x32xf32>
    %c0_45 = arith.constant 0 : index
    %c0_46 = arith.constant 0 : index
    %c0_47 = arith.constant 0 : index
    %205 = vector.load %arg10[%c0_45, %c0_46, %c0_47] : memref<2x8x32xf32, #tpu.memory_space<vmem>>, vector<2x8x32xf32>
    tpu.vector_store %arg10[%c0_45, %c0_46, %c0_47], %204 {strides = array<i32>} : memref<2x8x32xf32, #tpu.memory_space<vmem>>, vector<2x8x32xf32>,
    return
  }
  func.func @transform_0(%arg0: i32) -> (i32, i32) {
    %c0_i32 = arith.constant 0 : i32
    %c0_i32_0 = arith.constant 0 : i32
    %c0_i32_1 = arith.constant 0 : i32
    return %c0_i32, %c0_i32_0 : i32, i32
  }
  func.func @transform_1(%arg0: i32) -> (i32, i32, i32) {
    %c0_i32 = arith.constant 0 : i32
    %c0_i32_0 = arith.constant 0 : i32
    %c0_i32_1 = arith.constant 0 : i32
    %c0_i32_2 = arith.constant 0 : i32
    return %c0_i32, %c0_i32_0, %c0_i32_1 : i32, i32, i32
  }
  func.func @transform_2(%arg0: i32) -> (i32, i32, i32) {
    %c0_i32 = arith.constant 0 : i32
    %c0_i32_0 = arith.constant 0 : i32
    %c0_i32_1 = arith.constant 0 : i32
    %c0_i32_2 = arith.constant 0 : i32
    return %c0_i32, %c0_i32_0, %c0_i32_1 : i32, i32, i32
  }
  func.func @transform_3(%arg0: i32) -> (i32, i32) {
    %c0_i32 = arith.constant 0 : i32
    %c0_i32_0 = arith.constant 0 : i32
    %c0_i32_1 = arith.constant 0 : i32
    return %c0_i32, %c0_i32_0 : i32, i32
  }
  func.func @transform_4(%arg0: i32) -> (i32, i32) {
    %c0_i32 = arith.constant 0 : i32
    %c0_i32_0 = arith.constant 0 : i32
    %c0_i32_1 = arith.constant 0 : i32
    return %c0_i32, %c0_i32_0 : i32, i32
  }
  func.func @transform_5(%arg0: i32) -> (i32, i32) {
    %c0_i32 = arith.constant 0 : i32
    %c0_i32_0 = arith.constant 0 : i32
    %c0_i32_1 = arith.constant 0 : i32
    return %c0_i32, %c0_i32_0 : i32, i32
  }
  func.func @transform_6(%arg0: i32) -> (i32, i32) {
    %c0_i32 = arith.constant 0 : i32
    %c0_i32_0 = arith.constant 0 : i32
    %c0_i32_1 = arith.constant 0 : i32
    return %c0_i32, %c0_i32_0 : i32, i32
  }
  func.func @transform_7(%arg0: i32) -> (i32, i32) {
    %c0_i32 = arith.constant 0 : i32
    %c0_i32_0 = arith.constant 0 : i32
    %c0_i32_1 = arith.constant 0 : i32
    return %c0_i32, %c0_i32_0 : i32, i32
  }
  func.func @transform_8(%arg0: i32) -> (i32, i32) {
    %c0_i32 = arith.constant 0 : i32
    %c0_i32_0 = arith.constant 0 : i32
    %c0_i32_1 = arith.constant 0 : i32
    return %c0_i32, %c0_i32_0 : i32, i32
  }
  func.func @transform_9(%arg0: i32) -> (i32, i32, i32) {
    %c0_i32 = arith.constant 0 : i32
    %c0_i32_0 = arith.constant 0 : i32
    %c0_i32_1 = arith.constant 0 : i32
    %c0_i32_2 = arith.constant 0 : i32
    return %c0_i32, %c0_i32_0, %c0_i32_1 : i32, i32, i32
  }
}

</mosaic_0001>

<llo_original>
// kernel: tpu_custom_call.1
$region0: #{tpu_custom_call.1}
  #allocation0 [shape = 'u32[]', space=smem, size = 0x4, offset = 0x4, fixed_abs, tag = 'smem constant byte address 0x4 - core index']
  #allocation1 [shape = 'u32[144,128]{1,0:T(1,128)}', space=vmem, size = 0x12000, scoped, tag = 'internal scratch']
  %s0 = inlined_call_operand.vmem [shape: s32[2,1], index: 0, kind: input, shape index: {}]
  %s1 = inlined_call_operand.vmem [shape: f32[2,8,32], index: 1, kind: input, shape index: {}]
  %s2 = inlined_call_operand.vmem [shape: f32[2,60,32], index: 2, kind: input, shape index: {}]
  %s3 = inlined_call_operand.vmem [shape: f32[32,128], index: 3, kind: input, shape index: {}]
  %s4 = inlined_call_operand.vmem [shape: f32[32,128], index: 4, kind: input, shape index: {}]
  %s5 = inlined_call_operand.vmem [shape: f32[1,128], index: 5, kind: input, shape index: {}]
  %s6 = inlined_call_operand.vmem [shape: f32[32,32], index: 6, kind: input, shape index: {}]
  %s7 = inlined_call_operand.vmem [shape: f32[32,32], index: 7, kind: input, shape index: {}]
  %s8 = inlined_call_operand.vmem [shape: f32[1,32], index: 8, kind: input, shape index: {}]
  %s9 = inlined_call_operand.hbm [shape: f32[2,8,32], index: 9, kind: output, shape index: {}]
  %s10 = sld [smem:[#allocation0]]
  $region46: #{tpu_custom_call.1} parent=0
    _
  %s12 = ssub.s32 1, %s10
  %s13 = scalar_select 0, %s12, %s10
  $region1: #{tpu_custom_call.1} parent=0
    #allocation2 [shape = 'u8[8192]{0}', space=vmem, size = 0x2000, scoped, tag = 'output window, operand 0, single buffered']
    #allocation3 [shape = 's32[1]{0}', space=sflag, size = 0x4, scoped, tag = 'scoped memory for tpu_custom_call.1']
    %14 = vsyncpa [#allocation3], 0
    // Predicated region
    $region2: #{tpu_custom_call.1} parent=1 // pred_check
      _
    $region3: #{tpu_custom_call.1} parent=1 // pred_check_branch
      %16 = sbr.rel (0) target = $region5
    $region4: #{tpu_custom_call.1} parent=1 // pred_region
      _
    $region5: #{tpu_custom_call.1} parent=1 // pred_fallthru
      _
    // Predicated region
    $region6: #{tpu_custom_call.1} parent=1 // pred_check
      _
    $region7: #{tpu_custom_call.1} parent=1 // pred_check_branch
      %18 = sbr.rel (0) target = $region9
    $region8: #{tpu_custom_call.1} parent=1 // pred_region
      _
    $region9: #{tpu_custom_call.1} parent=1 // pred_fallthru
      _
    // Predicated region
    $region10: #{tpu_custom_call.1} parent=1 // pred_check
      _
    $region11: #{tpu_custom_call.1} parent=1 // pred_check_branch
      %20 = sbr.rel (0) target = $region13
    $region12: #{tpu_custom_call.1} parent=1 // pred_region
      _
    $region13: #{tpu_custom_call.1} parent=1 // pred_fallthru
      _
    // Predicated region
    $region14: #{tpu_custom_call.1} parent=1 // pred_check
      _
    $region15: #{tpu_custom_call.1} parent=1 // pred_check_branch
      %22 = sbr.rel (0) target = $region17
    $region16: #{tpu_custom_call.1} parent=1 // pred_region
      _
    $region17: #{tpu_custom_call.1} parent=1 // pred_fallthru
      _
    // Predicated region
    $region18: #{tpu_custom_call.1} parent=1 // pred_check
      _
    $region19: #{tpu_custom_call.1} parent=1 // pred_check_branch
      %24 = sbr.rel (0) target = $region21
    $region20: #{tpu_custom_call.1} parent=1 // pred_region
      _
    $region21: #{tpu_custom_call.1} parent=1 // pred_fallthru
      _
    // Predicated region
    $region22: #{tpu_custom_call.1} parent=1 // pred_check
      _
    $region23: #{tpu_custom_call.1} parent=1 // pred_check_branch
      %26 = sbr.rel (0) target = $region25
    $region24: #{tpu_custom_call.1} parent=1 // pred_region
      _
    $region25: #{tpu_custom_call.1} parent=1 // pred_fallthru
      _
    // Predicated region
    $region26: #{tpu_custom_call.1} parent=1 // pred_check
      _
    $region27: #{tpu_custom_call.1} parent=1 // pred_check_branch
      %28 = sbr.rel (0) target = $region29
    $region28: #{tpu_custom_call.1} parent=1 // pred_region
      _
    $region29: #{tpu_custom_call.1} parent=1 // pred_fallthru
      _
    // Predicated region
    $region30: #{tpu_custom_call.1} parent=1 // pred_check
      _
    $region31: #{tpu_custom_call.1} parent=1 // pred_check_branch
      %30 = sbr.rel (0) target = $region33
    $region32: #{tpu_custom_call.1} parent=1 // pred_region
      _
    $region33: #{tpu_custom_call.1} parent=1 // pred_fallthru
      _
    // Predicated region
    $region34: #{tpu_custom_call.1} parent=1 // pred_check
      _
    $region35: #{tpu_custom_call.1} parent=1 // pred_check_branch
      %32 = sbr.rel (0) target = $region37
    $region36: #{tpu_custom_call.1} parent=1 // pred_region
      _
    $region37: #{tpu_custom_call.1} parent=1 // pred_fallthru
      _
    %v33 = vld [vmem:[%s1] sm:$0xff]
    %v34 = vld [vmem:[%s1 + $0x8] sm:$0xff]
    %v35 = vld [vmem:[%s3] sm:$0xff]
    %v36 = vld [vmem:[%s3 + $0x8] sm:$0xff]
    %v37 = vld [vmem:[%s3 + $0x10] sm:$0xff]
    %v38 = vld [vmem:[%s3 + $0x18] sm:$0xff]
    %v39 = vld [vmem:[%s5] sm:$0x1]
    %v41 = vlaneseq
    %v42 = vshrl.u32 %v41, 7
    %v43 = vsub.s32 0, %v42
    %v44 = vrot.slane %v39, %v43
    %vm46 = vcmask 261120
    %v48 = vsel %vm46, %v33, 0
    %v51 = vsel %vm46, %v34, 0
    %53 = vmatprep.subr.mxu0 0.0
    %54 = vmatpush1.msra.mxu0 0.0
    %55 = vmatprep.subr.mxu0 0.0
    %56 = vmatpush1.msra.mxu0 0.0
    %57 = vmatprep.subr.mxu0 0.0
    %58 = vmatpush1.msra.mxu0 0.0
    %59 = vmatprep.subr.mxu0 0.0
    %60 = vmatpush1.msra.mxu0 0.0
    %61 = vmatprep.subr.mxu0 0.0
    %62 = vmatpush1.msra.mxu0 0.0
    %63 = vmatprep.subr.mxu0 0.0
    %64 = vmatpush1.msra.mxu0 0.0
    %65 = vmatprep.subr.mxu0 0.0
    %66 = vmatpush1.msra.mxu0 0.0
    %67 = vmatprep.subr.mxu0 0.0
    %68 = vmatpush1.msra.mxu0 0.0
    %69 = vmatprep.subr.mxu0 0.0
    %70 = vmatpush1.msra.mxu0 0.0
    %71 = vmatprep.subr.mxu0 0.0
    %72 = vmatpush1.msra.mxu0 0.0
    %73 = vmatprep.subr.mxu0 0.0
    %74 = vmatpush1.msra.mxu0 0.0
    %75 = vmatprep.subr.mxu0 0.0
    %76 = vmatpush1.msra.mxu0 0.0
    %77 = vmatprep.subr.mxu0 0.0
    %78 = vmatpush1.msra.mxu0 %v38
    %79 = vmatprep.subr.mxu0 0.0
    %80 = vmatpush1.msra.mxu0 %v37
    %81 = vmatprep.subr.mxu0 0.0
    %82 = vmatpush1.msra.mxu0 %v36
    %83 = vmatprep.subr.mxu0 0.0
    %84 = vmatpush1.msra.mxu0 %v35
    %85 = vmatprep.subr.mxu0 0.0
    %86 = vmatpush2.msra.mxu0 0.0
    %87 = vmatprep.subr.mxu0 0.0
    %88 = vmatpush2.msra.mxu0 0.0
    %89 = vmatprep.subr.mxu0 0.0
    %90 = vmatpush2.msra.mxu0 0.0
    %91 = vmatprep.subr.mxu0 0.0
    %92 = vmatpush2.msra.mxu0 0.0
    %93 = vmatprep.subr.mxu0 0.0
    %94 = vmatpush2.msra.mxu0 0.0
    %95 = vmatprep.subr.mxu0 0.0
    %96 = vmatpush2.msra.mxu0 0.0
    %97 = vmatprep.subr.mxu0 0.0
    %98 = vmatpush2.msra.mxu0 0.0
    %99 = vmatprep.subr.mxu0 0.0
    %100 = vmatpush2.msra.mxu0 0.0
    %101 = vmatprep.subr.mxu0 0.0
    %102 = vmatpush2.msra.mxu0 0.0
    %103 = vmatprep.subr.mxu0 0.0
    %104 = vmatpush2.msra.mxu0 0.0
    %105 = vmatprep.subr.mxu0 0.0
    %106 = vmatpush2.msra.mxu0 0.0
    %107 = vmatprep.subr.mxu0 0.0
    %108 = vmatpush2.msra.mxu0 0.0
    %109 = vmatprep.subr.mxu0 0.0
    %110 = vmatpush2.msra.mxu0 0.0
    %111 = vmatprep.subr.mxu0 0.0
    %112 = vmatpush2.msra.mxu0 0.0
    %113 = vmatprep.subr.mxu0 0.0
    %114 = vmatpush2.msra.mxu0 0.0
    %115 = vmatprep.subr.mxu0 0.0
    %116 = vmatpush2.msra.mxu0 0.0
    %117 = vmatprep.mubr.f32.mxu0 0.0
    %118 = vmatmul.mubr.f32.gmra.mxu0 %v48
    %v119 = vpop.f32.mrf.mxu0
    %v120 = vadd.f32 %v44, %v119
    %v121 = vpop.f32.mrf.mxu0
    %122 = vmatprep.mubr.f32.mxu0 0.0
    %123 = vmatmul.mubr.f32.gmra.mxu0 %v51
    %v124 = vpop.f32.mrf.mxu0
    %v125 = vadd.f32 %v44, %v124
    %v126 = vpop.f32.mrf.mxu0
    %127 = vdwg.mxu0
    %v128 = vld [vmem:[%s4] sm:$0xff]
    %v129 = vld [vmem:[%s4 + $0x8] sm:$0xff]
    %v130 = vld [vmem:[%s4 + $0x10] sm:$0xff]
    %v131 = vld [vmem:[%s4 + $0x18] sm:$0xff]
    %v133 = vsel %vm46, 0.0, 0
    %135 = vmatprep.subr.mxu0 0.0
    %136 = vmatpush1.msra.mxu0 0.0
    %137 = vmatprep.subr.mxu0 0.0
    %138 = vmatpush1.msra.mxu0 0.0
    %139 = vmatprep.subr.mxu0 0.0
    %140 = vmatpush1.msra.mxu0 0.0
    %141 = vmatprep.subr.mxu0 0.0
    %142 = vmatpush1.msra.mxu0 0.0
    %143 = vmatprep.subr.mxu0 0.0
    %144 = vmatpush1.msra.mxu0 0.0
    %145 = vmatprep.subr.mxu0 0.0
    %146 = vmatpush1.msra.mxu0 0.0
    %147 = vmatprep.subr.mxu0 0.0
    %148 = vmatpush1.msra.mxu0 0.0
    %149 = vmatprep.subr.mxu0 0.0
    %150 = vmatpush1.msra.mxu0 0.0
    %151 = vmatprep.subr.mxu0 0.0
    %152 = vmatpush1.msra.mxu0 0.0
    %153 = vmatprep.subr.mxu0 0.0
    %154 = vmatpush1.msra.mxu0 0.0
    %155 = vmatprep.subr.mxu0 0.0
    %156 = vmatpush1.msra.mxu0 0.0
    %157 = vmatprep.subr.mxu0 0.0
    %158 = vmatpush1.msra.mxu0 0.0
    %159 = vmatprep.subr.mxu0 0.0
    %160 = vmatpush1.msra.mxu0 %v131
    %161 = vmatprep.subr.mxu0 0.0
    %162 = vmatpush1.msra.mxu0 %v130
    %163 = vmatprep.subr.mxu0 0.0
    %164 = vmatpush1.msra.mxu0 %v129
    %165 = vmatprep.subr.mxu0 0.0
    %166 = vmatpush1.msra.mxu0 %v128
    %167 = vmatprep.subr.mxu0 0.0
    %168 = vmatpush2.msra.mxu0 0.0
    %169 = vmatprep.subr.mxu0 0.0
    %170 = vmatpush2.msra.mxu0 0.0
    %171 = vmatprep.subr.mxu0 0.0
    %172 = vmatpush2.msra.mxu0 0.0
    %173 = vmatprep.subr.mxu0 0.0
    %174 = vmatpush2.msra.mxu0 0.0
    %175 = vmatprep.subr.mxu0 0.0
    %176 = vmatpush2.msra.mxu0 0.0
    %177 = vmatprep.subr.mxu0 0.0
    %178 = vmatpush2.msra.mxu0 0.0
    %179 = vmatprep.subr.mxu0 0.0
    %180 = vmatpush2.msra.mxu0 0.0
    %181 = vmatprep.subr.mxu0 0.0
    %182 = vmatpush2.msra.mxu0 0.0
    %183 = vmatprep.subr.mxu0 0.0
    %184 = vmatpush2.msra.mxu0 0.0
    %185 = vmatprep.subr.mxu0 0.0
    %186 = vmatpush2.msra.mxu0 0.0
    %187 = vmatprep.subr.mxu0 0.0
    %188 = vmatpush2.msra.mxu0 0.0
    %189 = vmatprep.subr.mxu0 0.0
    %190 = vmatpush2.msra.mxu0 0.0
    %191 = vmatprep.subr.mxu0 0.0
    %192 = vmatpush2.msra.mxu0 0.0
    %193 = vmatprep.subr.mxu0 0.0
    %194 = vmatpush2.msra.mxu0 0.0
    %195 = vmatprep.subr.mxu0 0.0
    %196 = vmatpush2.msra.mxu0 0.0
    %197 = vmatprep.subr.mxu0 0.0
    %198 = vmatpush2.msra.mxu0 0.0
    %199 = vmatprep.mubr.f32.mxu0 0.0
    %200 = vmatmul.mubr.f32.gmra.mxu0 %v133
    %v201 = vpop.f32.mrf.mxu0
    %v202 = vadd.f32 0.0, %v201
    %v203 = vpop.f32.mrf.mxu0
    %204 = vdwg.mxu0
    %v206 = vrot.slane %v202, 1
    %v209 = vadd.f32 %v120, %v202
    %v210 = vadd.f32 %v125, %v206
    %v211 = vxor.u32 %v209, 2147483648
    %v212 = vxor.u32 %v210, 2147483648
    %v213 = vmul.f32 %v211, 1.442695
    %v214 = vpow.pop %v213
    %v215 = vmul.f32 %v212, 1.442695
    %v216 = vpow.pop %v215
    %v217 = vadd.f32 %v214, 1.0
    %v218 = vadd.f32 %v216, 1.0
    %v219 = vrcp.pop %v217
    %v220 = vmul.f32 1.0, %v219
    %v221 = vrcp.pop %v218
    %v222 = vmul.f32 1.0, %v221
    %v223 = vtanh.pop %v209
    %v224 = vtanh.pop %v210
    %v225 = vmul.f32 %v220, 0.0
    %v226 = vmul.f32 %v222, 0.0
    %229 = vrot.lane.b32.xlu0 %v223, 64
    %v230 = vpop.permute.xlu0 %229
    %231 = vrot.lane.b32.xlu0 %v224, 64
    %v232 = vpop.permute.xlu0 %231
    %v235 = vmul.f32 %v220, %v230
    %v236 = vmul.f32 %v222, %v232
    %239 = vrot.lane.b32.xlu0 %v235, 32
    %v240 = vpop.permute.xlu0 %239
    %241 = vrot.lane.b32.xlu0 %v236, 32
    %v242 = vpop.permute.xlu0 %241
    %v245 = vadd.f32 %v225, %v240
    %v246 = vadd.f32 %v226, %v242
    %v247 = vtanh.pop %v245
    %v248 = vtanh.pop %v246
    %251 = vrot.lane.b32.xlu0 %v247, 64
    %v252 = vpop.permute.xlu0 %251
    %253 = vrot.lane.b32.xlu0 %v248, 64
    %v254 = vpop.permute.xlu0 %253
    %v257 = vmul.f32 %v220, %v252
    %v258 = vmul.f32 %v222, %v254
    %v261 = vrot.slane %v258, 7
    %vm262 = vcmask 1041409
    %v263 = vsel %vm262, %v261, %v257
    %264 = vrot.lane.b32.xlu0 %v263, 32
    %v265 = vpop.permute.xlu0 %264
    %v266 = vsel %vm46, %v265, 0
    %268 = vmatprep.subr.mxu0 0.0
    %269 = vmatpush1.msra.mxu0 0.0
    %270 = vmatprep.subr.mxu0 0.0
    %271 = vmatpush1.msra.mxu0 0.0
    %272 = vmatprep.subr.mxu0 0.0
    %273 = vmatpush1.msra.mxu0 0.0
    %274 = vmatprep.subr.mxu0 0.0
    %275 = vmatpush1.msra.mxu0 0.0
    %276 = vmatprep.subr.mxu0 0.0
    %277 = vmatpush1.msra.mxu0 0.0
    %278 = vmatprep.subr.mxu0 0.0
    %279 = vmatpush1.msra.mxu0 0.0
    %280 = vmatprep.subr.mxu0 0.0
    %281 = vmatpush1.msra.mxu0 0.0
    %282 = vmatprep.subr.mxu0 0.0
    %283 = vmatpush1.msra.mxu0 0.0
    %284 = vmatprep.subr.mxu0 0.0
    %285 = vmatpush1.msra.mxu0 0.0
    %286 = vmatprep.subr.mxu0 0.0
    %287 = vmatpush1.msra.mxu0 0.0
    %288 = vmatprep.subr.mxu0 0.0
    %289 = vmatpush1.msra.mxu0 0.0
    %290 = vmatprep.subr.mxu0 0.0
    %291 = vmatpush1.msra.mxu0 0.0
    %292 = vmatprep.subr.mxu0 0.0
    %293 = vmatpush1.msra.mxu0 %v131
    %294 = vmatprep.subr.mxu0 0.0
    %295 = vmatpush1.msra.mxu0 %v130
    %296 = vmatprep.subr.mxu0 0.0
    %297 = vmatpush1.msra.mxu0 %v129
    %298 = vmatprep.subr.mxu0 0.0
    %299 = vmatpush1.msra.mxu0 %v128
    %300 = vmatprep.subr.mxu0 0.0
    %301 = vmatpush2.msra.mxu0 0.0
    %302 = vmatprep.subr.mxu0 0.0
    %303 = vmatpush2.msra.mxu0 0.0
    %304 = vmatprep.subr.mxu0 0.0
    %305 = vmatpush2.msra.mxu0 0.0
    %306 = vmatprep.subr.mxu0 0.0
    %307 = vmatpush2.msra.mxu0 0.0
    %308 = vmatprep.subr.mxu0 0.0
    %309 = vmatpush2.msra.mxu0 0.0
    %310 = vmatprep.subr.mxu0 0.0
    %311 = vmatpush2.msra.mxu0 0.0
    %312 = vmatprep.subr.mxu0 0.0
    %313 = vmatpush2.msra.mxu0 0.0
    %314 = vmatprep.subr.mxu0 0.0
    %315 = vmatpush2.msra.mxu0 0.0
    %316 = vmatprep.subr.mxu0 0.0
    %317 = vmatpush2.msra.mxu0 0.0
    %318 = vmatprep.subr.mxu0 0.0
    %319 = vmatpush2.msra.mxu0 0.0
    %320 = vmatprep.subr.mxu0 0.0
    %321 = vmatpush2.msra.mxu0 0.0
    %322 = vmatprep.subr.mxu0 0.0
    %323 = vmatpush2.msra.mxu0 0.0
    %324 = vmatprep.subr.mxu0 0.0
    %325 = vmatpush2.msra.mxu0 0.0
    %326 = vmatprep.subr.mxu0 0.0
    %327 = vmatpush2.msra.mxu0 0.0
    %328 = vmatprep.subr.mxu0 0.0
    %329 = vmatpush2.msra.mxu0 0.0
    %330 = vmatprep.subr.mxu0 0.0
    %331 = vmatpush2.msra.mxu0 0.0
    %332 = vmatprep.mubr.f32.mxu0 0.0
    %333 = vmatmul.mubr.f32.gmra.mxu0 %v266
    %v334 = vpop.f32.mrf.mxu0
    %v335 = vadd.f32 0.0, %v334
    %v336 = vpop.f32.mrf.mxu0
    %337 = vdwg.mxu0
    %v339 = vrot.slane %v335, 7
    %v342 = vadd.f32 %v120, %v339
    %v343 = vadd.f32 %v125, %v335
    %v344 = vxor.u32 %v342, 2147483648
    %v345 = vxor.u32 %v343, 2147483648
    %v346 = vmul.f32 %v344, 1.442695
    %v347 = vpow.pop %v346
    %v348 = vmul.f32 %v345, 1.442695
    %v349 = vpow.pop %v348
    %v350 = vadd.f32 %v347, 1.0
    %v351 = vadd.f32 %v349, 1.0
    %v352 = vrcp.pop %v350
    %v353 = vmul.f32 1.0, %v352
    %v354 = vrcp.pop %v351
    %v355 = vmul.f32 1.0, %v354
    %v356 = vtanh.pop %v342
    %v357 = vtanh.pop %v343
    %v360 = vrot.slane %v245, 7
    %v361 = vrot.slane %v246, 7
    %v364 = vmul.f32 %v353, %v360
    %v365 = vmul.f32 %v355, %v361
    %368 = vrot.lane.b32.xlu0 %v356, 64
    %v369 = vpop.permute.xlu0 %368
    %370 = vrot.lane.b32.xlu0 %v357, 64
    %v371 = vpop.permute.xlu0 %370
    %v374 = vmul.f32 %v353, %v369
    %v375 = vmul.f32 %v355, %v371
    %378 = vrot.lane.b32.xlu0 %v374, 32
    %v379 = vpop.permute.xlu0 %378
    %380 = vrot.lane.b32.xlu0 %v375, 32
    %v381 = vpop.permute.xlu0 %380
    %v384 = vadd.f32 %v364, %v379
    %v385 = vadd.f32 %v365, %v381
    %v386 = vtanh.pop %v384
    %v387 = vtanh.pop %v385
    %390 = vrot.lane.b32.xlu0 %v386, 64
    %v391 = vpop.permute.xlu0 %390
    %392 = vrot.lane.b32.xlu0 %v387, 64
    %v393 = vpop.permute.xlu0 %392
    %v396 = vmul.f32 %v353, %v391
    %v397 = vmul.f32 %v355, %v393
    %v400 = vrot.slane %v396, 1
    %v401 = vsel %vm262, %v397, %v400
    %402 = vrot.lane.b32.xlu0 %v401, 32
    %v403 = vpop.permute.xlu0 %402
    %v404 = vsel %vm46, %v403, 0
    %406 = vmatprep.subr.mxu0 0.0
    %407 = vmatpush1.msra.mxu0 0.0
    %408 = vmatprep.subr.mxu0 0.0
    %409 = vmatpush1.msra.mxu0 0.0
    %410 = vmatprep.subr.mxu0 0.0
    %411 = vmatpush1.msra.mxu0 0.0
    %412 = vmatprep.subr.mxu0 0.0
    %413 = vmatpush1.msra.mxu0 0.0
    %414 = vmatprep.subr.mxu0 0.0
    %415 = vmatpush1.msra.mxu0 0.0
    %416 = vmatprep.subr.mxu0 0.0
    %417 = vmatpush1.msra.mxu0 0.0
    %418 = vmatprep.subr.mxu0 0.0
    %419 = vmatpush1.msra.mxu0 0.0
    %420 = vmatprep.subr.mxu0 0.0
    %421 = vmatpush1.msra.mxu0 0.0
    %422 = vmatprep.subr.mxu0 0.0
    %423 = vmatpush1.msra.mxu0 0.0
    %424 = vmatprep.subr.mxu0 0.0
    %425 = vmatpush1.msra.mxu0 0.0
    %426 = vmatprep.subr.mxu0 0.0
    %427 = vmatpush1.msra.mxu0 0.0
    %428 = vmatprep.subr.mxu0 0.0
    %429 = vmatpush1.msra.mxu0 0.0
    %430 = vmatprep.subr.mxu0 0.0
    %431 = vmatpush1.msra.mxu0 %v131
    %432 = vmatprep.subr.mxu0 0.0
    %433 = vmatpush1.msra.mxu0 %v130
    %434 = vmatprep.subr.mxu0 0.0
    %435 = vmatpush1.msra.mxu0 %v129
    %436 = vmatprep.subr.mxu0 0.0
    %437 = vmatpush1.msra.mxu0 %v128
    %438 = vmatprep.subr.mxu0 0.0
    %439 = vmatpush2.msra.mxu0 0.0
    %440 = vmatprep.subr.mxu0 0.0
    %441 = vmatpush2.msra.mxu0 0.0
    %442 = vmatprep.subr.mxu0 0.0
    %443 = vmatpush2.msra.mxu0 0.0
    %444 = vmatprep.subr.mxu0 0.0
    %445 = vmatpush2.msra.mxu0 0.0
    %446 = vmatprep.subr.mxu0 0.0
    %447 = vmatpush2.msra.mxu0 0.0
    %448 = vmatprep.subr.mxu0 0.0
    %449 = vmatpush2.msra.mxu0 0.0
    %450 = vmatprep.subr.mxu0 0.0
    %451 = vmatpush2.msra.mxu0 0.0
    %452 = vmatprep.subr.mxu0 0.0
    %453 = vmatpush2.msra.mxu0 0.0
    %454 = vmatprep.subr.mxu0 0.0
    %455 = vmatpush2.msra.mxu0 0.0
    %456 = vmatprep.subr.mxu0 0.0
    %457 = vmatpush2.msra.mxu0 0.0
    %458 = vmatprep.subr.mxu0 0.0
    %459 = vmatpush2.msra.mxu0 0.0
    %460 = vmatprep.subr.mxu0 0.0
    %461 = vmatpush2.msra.mxu0 0.0
    %462 = vmatprep.subr.mxu0 0.0
    %463 = vmatpush2.msra.mxu0 0.0
    %464 = vmatprep.subr.mxu0 0.0
    %465 = vmatpush2.msra.mxu0 0.0
    %466 = vmatprep.subr.mxu0 0.0
    %467 = vmatpush2.msra.mxu0 0.0
    %468 = vmatprep.subr.mxu0 0.0
    %469 = vmatpush2.msra.mxu0 0.0
    %470 = vmatprep.mubr.f32.mxu0 0.0
    %471 = vmatmul.mubr.f32.gmra.mxu0 %v404
    %v472 = vpop.f32.mrf.mxu0
    %v473 = vadd.f32 0.0, %v472
    %v474 = vpop.f32.mrf.mxu0
    %475 = vdwg.mxu0
    %v477 = vrot.slane %v473, 6
    %v478 = vrot.slane %v473, 7
    %v481 = vadd.f32 %v120, %v477
    %v482 = vadd.f32 %v125, %v478
    %v483 = vxor.u32 %v481, 2147483648
    %v484 = vxor.u32 %v482, 2147483648
    %v485 = vmul.f32 %v483, 1.442695
    %v486 = vpow.pop %v485
    %v487 = vmul.f32 %v484, 1.442695
    %v488 = vpow.pop %v487
    %v489 = vadd.f32 %v486, 1.0
    %v490 = vadd.f32 %v488, 1.0
    %v491 = vrcp.pop %v489
    %v492 = vmul.f32 1.0, %v491
    %v493 = vrcp.pop %v490
    %v494 = vmul.f32 1.0, %v493
    %v495 = vtanh.pop %v481
    %v496 = vtanh.pop %v482
    %v499 = vrot.slane %v384, 7
    %v500 = vrot.slane %v385, 7
    %v503 = vmul.f32 %v492, %v499
    %v504 = vmul.f32 %v494, %v500
    %507 = vrot.lane.b32.xlu0 %v495, 64
    %v508 = vpop.permute.xlu0 %507
    %509 = vrot.lane.b32.xlu0 %v496, 64
    %v510 = vpop.permute.xlu0 %509
    %v513 = vmul.f32 %v492, %v508
    %v514 = vmul.f32 %v494, %v510
    %517 = vrot.lane.b32.xlu0 %v513, 32
    %v518 = vpop.permute.xlu0 %517
    %519 = vrot.lane.b32.xlu0 %v514, 32
    %v520 = vpop.permute.xlu0 %519
    %v523 = vadd.f32 %v503, %v518
    %v524 = vadd.f32 %v504, %v520
    %v525 = vtanh.pop %v523
    %v526 = vtanh.pop %v524
    %529 = vrot.lane.b32.xlu0 %v525, 64
    %v530 = vpop.permute.xlu0 %529
    %531 = vrot.lane.b32.xlu0 %v526, 64
    %v532 = vpop.permute.xlu0 %531
    %v535 = vmul.f32 %v492, %v530
    %v536 = vmul.f32 %v494, %v532
    %v539 = vrot.slane %v535, 2
    %v540 = vrot.slane %v536, 1
    %v541 = vsel %vm262, %v540, %v539
    %542 = vrot.lane.b32.xlu0 %v541, 32
    %v543 = vpop.permute.xlu0 %542
    %v544 = vsel %vm46, %v543, 0
    %546 = vmatprep.subr.mxu0 0.0
    %547 = vmatpush1.msra.mxu0 0.0
    %548 = vmatprep.subr.mxu0 0.0
    %549 = vmatpush1.msra.mxu0 0.0
    %550 = vmatprep.subr.mxu0 0.0
    %551 = vmatpush1.msra.mxu0 0.0
    %552 = vmatprep.subr.mxu0 0.0
    %553 = vmatpush1.msra.mxu0 0.0
    %554 = vmatprep.subr.mxu0 0.0
    %555 = vmatpush1.msra.mxu0 0.0
    %556 = vmatprep.subr.mxu0 0.0
    %557 = vmatpush1.msra.mxu0 0.0
    %558 = vmatprep.subr.mxu0 0.0
    %559 = vmatpush1.msra.mxu0 0.0
    %560 = vmatprep.subr.mxu0 0.0
    %561 = vmatpush1.msra.mxu0 0.0
    %562 = vmatprep.subr.mxu0 0.0
    %563 = vmatpush1.msra.mxu0 0.0
    %564 = vmatprep.subr.mxu0 0.0
    %565 = vmatpush1.msra.mxu0 0.0
    %566 = vmatprep.subr.mxu0 0.0
    %567 = vmatpush1.msra.mxu0 0.0
    %568 = vmatprep.subr.mxu0 0.0
    %569 = vmatpush1.msra.mxu0 0.0
    %570 = vmatprep.subr.mxu0 0.0
    %571 = vmatpush1.msra.mxu0 %v131
    %572 = vmatprep.subr.mxu0 0.0
    %573 = vmatpush1.msra.mxu0 %v130
    %574 = vmatprep.subr.mxu0 0.0
    %575 = vmatpush1.msra.mxu0 %v129
    %576 = vmatprep.subr.mxu0 0.0
    %577 = vmatpush1.msra.mxu0 %v128
    %578 = vmatprep.subr.mxu0 0.0
    %579 = vmatpush2.msra.mxu0 0.0
    %580 = vmatprep.subr.mxu0 0.0
    %581 = vmatpush2.msra.mxu0 0.0
    %582 = vmatprep.subr.mxu0 0.0
    %583 = vmatpush2.msra.mxu0 0.0
    %584 = vmatprep.subr.mxu0 0.0
    %585 = vmatpush2.msra.mxu0 0.0
    %586 = vmatprep.subr.mxu0 0.0
    %587 = vmatpush2.msra.mxu0 0.0
    %588 = vmatprep.subr.mxu0 0.0
    %589 = vmatpush2.msra.mxu0 0.0
    %590 = vmatprep.subr.mxu0 0.0
    %591 = vmatpush2.msra.mxu0 0.0
    %592 = vmatprep.subr.mxu0 0.0
    %593 = vmatpush2.msra.mxu0 0.0
    %594 = vmatprep.subr.mxu0 0.0
    %595 = vmatpush2.msra.mxu0 0.0
    %596 = vmatprep.subr.mxu0 0.0
    %597 = vmatpush2.msra.mxu0 0.0
    %598 = vmatprep.subr.mxu0 0.0
    %599 = vmatpush2.msra.mxu0 0.0
    %600 = vmatprep.subr.mxu0 0.0
    %601 = vmatpush2.msra.mxu0 0.0
    %602 = vmatprep.subr.mxu0 0.0
    %603 = vmatpush2.msra.mxu0 0.0
    %604 = vmatprep.subr.mxu0 0.0
    %605 = vmatpush2.msra.mxu0 0.0
    %606 = vmatprep.subr.mxu0 0.0
    %607 = vmatpush2.msra.mxu0 0.0
    %608 = vmatprep.subr.mxu0 0.0
    %609 = vmatpush2.msra.mxu0 0.0
    %610 = vmatprep.mubr.f32.mxu0 0.0
    %611 = vmatmul.mubr.f32.gmra.mxu0 %v544
    %v612 = vpop.f32.mrf.mxu0
    %v613 = vadd.f32 0.0, %v612
    %v614 = vpop.f32.mrf.mxu0
    %615 = vdwg.mxu0
    %v617 = vrot.slane %v613, 5
    %v618 = vrot.slane %v613, 6
    %v621 = vadd.f32 %v120, %v617
    %v622 = vadd.f32 %v125, %v618
    %v623 = vxor.u32 %v621, 2147483648
    %v624 = vxor.u32 %v622, 2147483648
    %v625 = vmul.f32 %v623, 1.442695
    %v626 = vpow.pop %v625
    %v627 = vmul.f32 %v624, 1.442695
    %v628 = vpow.pop %v627
    %v629 = vadd.f32 %v626, 1.0
    %v630 = vadd.f32 %v628, 1.0
    %v631 = vrcp.pop %v629
    %v632 = vmul.f32 1.0, %v631
    %v633 = vrcp.pop %v630
    %v634 = vmul.f32 1.0, %v633
    %v635 = vtanh.pop %v621
    %v636 = vtanh.pop %v622
    %v639 = vrot.slane %v523, 7
    %v640 = vrot.slane %v524, 7
    %v643 = vmul.f32 %v632, %v639
    %v644 = vmul.f32 %v634, %v640
    %647 = vrot.lane.b32.xlu0 %v635, 64
    %v648 = vpop.permute.xlu0 %647
    %649 = vrot.lane.b32.xlu0 %v636, 64
    %v650 = vpop.permute.xlu0 %649
    %v653 = vmul.f32 %v632, %v648
    %v654 = vmul.f32 %v634, %v650
    %657 = vrot.lane.b32.xlu0 %v653, 32
    %v658 = vpop.permute.xlu0 %657
    %659 = vrot.lane.b32.xlu0 %v654, 32
    %v660 = vpop.permute.xlu0 %659
    %v663 = vadd.f32 %v643, %v658
    %v664 = vadd.f32 %v644, %v660
    %v665 = vtanh.pop %v663
    %v666 = vtanh.pop %v664
    %669 = vrot.lane.b32.xlu0 %v665, 64
    %v670 = vpop.permute.xlu0 %669
    %671 = vrot.lane.b32.xlu0 %v666, 64
    %v672 = vpop.permute.xlu0 %671
    %v675 = vmul.f32 %v632, %v670
    %v676 = vmul.f32 %v634, %v672
    %v679 = vrot.slane %v675, 3
    %v680 = vrot.slane %v676, 2
    %v681 = vsel %vm262, %v680, %v679
    %682 = vrot.lane.b32.xlu0 %v681, 32
    %v683 = vpop.permute.xlu0 %682
    %v684 = vsel %vm46, %v683, 0
    %686 = vmatprep.subr.mxu0 0.0
    %687 = vmatpush1.msra.mxu0 0.0
    %688 = vmatprep.subr.mxu0 0.0
    %689 = vmatpush1.msra.mxu0 0.0
    %690 = vmatprep.subr.mxu0 0.0
    %691 = vmatpush1.msra.mxu0 0.0
    %692 = vmatprep.subr.mxu0 0.0
    %693 = vmatpush1.msra.mxu0 0.0
    %694 = vmatprep.subr.mxu0 0.0
    %695 = vmatpush1.msra.mxu0 0.0
    %696 = vmatprep.subr.mxu0 0.0
    %697 = vmatpush1.msra.mxu0 0.0
    %698 = vmatprep.subr.mxu0 0.0
    %699 = vmatpush1.msra.mxu0 0.0
    %700 = vmatprep.subr.mxu0 0.0
    %701 = vmatpush1.msra.mxu0 0.0
    %702 = vmatprep.subr.mxu0 0.0
    %703 = vmatpush1.msra.mxu0 0.0
    %704 = vmatprep.subr.mxu0 0.0
    %705 = vmatpush1.msra.mxu0 0.0
    %706 = vmatprep.subr.mxu0 0.0
    %707 = vmatpush1.msra.mxu0 0.0
    %708 = vmatprep.subr.mxu0 0.0
    %709 = vmatpush1.msra.mxu0 0.0
    %710 = vmatprep.subr.mxu0 0.0
    %711 = vmatpush1.msra.mxu0 %v131
    %712 = vmatprep.subr.mxu0 0.0
    %713 = vmatpush1.msra.mxu0 %v130
    %714 = vmatprep.subr.mxu0 0.0
    %715 = vmatpush1.msra.mxu0 %v129
    %716 = vmatprep.subr.mxu0 0.0
    %717 = vmatpush1.msra.mxu0 %v128
    %718 = vmatprep.subr.mxu0 0.0
    %719 = vmatpush2.msra.mxu0 0.0
    %720 = vmatprep.subr.mxu0 0.0
    %721 = vmatpush2.msra.mxu0 0.0
    %722 = vmatprep.subr.mxu0 0.0
    %723 = vmatpush2.msra.mxu0 0.0
    %724 = vmatprep.subr.mxu0 0.0
    %725 = vmatpush2.msra.mxu0 0.0
    %726 = vmatprep.subr.mxu0 0.0
    %727 = vmatpush2.msra.mxu0 0.0
    %728 = vmatprep.subr.mxu0 0.0
    %729 = vmatpush2.msra.mxu0 0.0
    %730 = vmatprep.subr.mxu0 0.0
    %731 = vmatpush2.msra.mxu0 0.0
    %732 = vmatprep.subr.mxu0 0.0
    %733 = vmatpush2.msra.mxu0 0.0
    %734 = vmatprep.subr.mxu0 0.0
    %735 = vmatpush2.msra.mxu0 0.0
    %736 = vmatprep.subr.mxu0 0.0
    %737 = vmatpush2.msra.mxu0 0.0
    %738 = vmatprep.subr.mxu0 0.0
    %739 = vmatpush2.msra.mxu0 0.0
    %740 = vmatprep.subr.mxu0 0.0
    %741 = vmatpush2.msra.mxu0 0.0
    %742 = vmatprep.subr.mxu0 0.0
    %743 = vmatpush2.msra.mxu0 0.0
    %744 = vmatprep.subr.mxu0 0.0
    %745 = vmatpush2.msra.mxu0 0.0
    %746 = vmatprep.subr.mxu0 0.0
    %747 = vmatpush2.msra.mxu0 0.0
    %748 = vmatprep.subr.mxu0 0.0
    %749 = vmatpush2.msra.mxu0 0.0
    %750 = vmatprep.mubr.f32.mxu0 0.0
    %751 = vmatmul.mubr.f32.gmra.mxu0 %v684
    %v752 = vpop.f32.mrf.mxu0
    %v753 = vadd.f32 0.0, %v752
    %v754 = vpop.f32.mrf.mxu0
    %755 = vdwg.mxu0
    %v757 = vrot.slane %v753, 4
    %v758 = vrot.slane %v753, 5
    %v761 = vadd.f32 %v120, %v757
    %v762 = vadd.f32 %v125, %v758
    %v763 = vxor.u32 %v761, 2147483648
    %v764 = vxor.u32 %v762, 2147483648
    %v765 = vmul.f32 %v763, 1.442695
    %v766 = vpow.pop %v765
    %v767 = vmul.f32 %v764, 1.442695
    %v768 = vpow.pop %v767
    %v769 = vadd.f32 %v766, 1.0
    %v770 = vadd.f32 %v768, 1.0
    %v771 = vrcp.pop %v769
    %v772 = vmul.f32 1.0, %v771
    %v773 = vrcp.pop %v770
    %v774 = vmul.f32 1.0, %v773
    %v775 = vtanh.pop %v761
    %v776 = vtanh.pop %v762
    %v779 = vrot.slane %v663, 7
    %v780 = vrot.slane %v664, 7
    %v783 = vmul.f32 %v772, %v779
    %v784 = vmul.f32 %v774, %v780
    %787 = vrot.lane.b32.xlu0 %v775, 64
    %v788 = vpop.permute.xlu0 %787
    %789 = vrot.lane.b32.xlu0 %v776, 64
    %v790 = vpop.permute.xlu0 %789
    %v793 = vmul.f32 %v772, %v788
    %v794 = vmul.f32 %v774, %v790
    %797 = vrot.lane.b32.xlu0 %v793, 32
    %v798 = vpop.permute.xlu0 %797
    %799 = vrot.lane.b32.xlu0 %v794, 32
    %v800 = vpop.permute.xlu0 %799
    %v803 = vadd.f32 %v783, %v798
    %v804 = vadd.f32 %v784, %v800
    %v805 = vtanh.pop %v803
    %v806 = vtanh.pop %v804
    %809 = vrot.lane.b32.xlu0 %v805, 64
    %v810 = vpop.permute.xlu0 %809
    %811 = vrot.lane.b32.xlu0 %v806, 64
    %v812 = vpop.permute.xlu0 %811
    %v815 = vmul.f32 %v772, %v810
    %v816 = vmul.f32 %v774, %v812
    %v819 = vrot.slane %v815, 4
    %v820 = vrot.slane %v816, 3
    %v821 = vsel %vm262, %v820, %v819
    %822 = vrot.lane.b32.xlu0 %v821, 32
    %v823 = vpop.permute.xlu0 %822
    %v824 = vsel %vm46, %v823, 0
    %826 = vmatprep.subr.mxu0 0.0
    %827 = vmatpush1.msra.mxu0 0.0
    %828 = vmatprep.subr.mxu0 0.0
    %829 = vmatpush1.msra.mxu0 0.0
    %830 = vmatprep.subr.mxu0 0.0
    %831 = vmatpush1.msra.mxu0 0.0
    %832 = vmatprep.subr.mxu0 0.0
    %833 = vmatpush1.msra.mxu0 0.0
    %834 = vmatprep.subr.mxu0 0.0
    %835 = vmatpush1.msra.mxu0 0.0
    %836 = vmatprep.subr.mxu0 0.0
    %837 = vmatpush1.msra.mxu0 0.0
    %838 = vmatprep.subr.mxu0 0.0
    %839 = vmatpush1.msra.mxu0 0.0
    %840 = vmatprep.subr.mxu0 0.0
    %841 = vmatpush1.msra.mxu0 0.0
    %842 = vmatprep.subr.mxu0 0.0
    %843 = vmatpush1.msra.mxu0 0.0
    %844 = vmatprep.subr.mxu0 0.0
    %845 = vmatpush1.msra.mxu0 0.0
    %846 = vmatprep.subr.mxu0 0.0
    %847 = vmatpush1.msra.mxu0 0.0
    %848 = vmatprep.subr.mxu0 0.0
    %849 = vmatpush1.msra.mxu0 0.0
    %850 = vmatprep.subr.mxu0 0.0
    %851 = vmatpush1.msra.mxu0 %v131
    %852 = vmatprep.subr.mxu0 0.0
    %853 = vmatpush1.msra.mxu0 %v130
    %854 = vmatprep.subr.mxu0 0.0
    %855 = vmatpush1.msra.mxu0 %v129
    %856 = vmatprep.subr.mxu0 0.0
    %857 = vmatpush1.msra.mxu0 %v128
    %858 = vmatprep.subr.mxu0 0.0
    %859 = vmatpush2.msra.mxu0 0.0
    %860 = vmatprep.subr.mxu0 0.0
    %861 = vmatpush2.msra.mxu0 0.0
    %862 = vmatprep.subr.mxu0 0.0
    %863 = vmatpush2.msra.mxu0 0.0
    %864 = vmatprep.subr.mxu0 0.0
    %865 = vmatpush2.msra.mxu0 0.0
    %866 = vmatprep.subr.mxu0 0.0
    %867 = vmatpush2.msra.mxu0 0.0
    %868 = vmatprep.subr.mxu0 0.0
    %869 = vmatpush2.msra.mxu0 0.0
    %870 = vmatprep.subr.mxu0 0.0
    %871 = vmatpush2.msra.mxu0 0.0
    %872 = vmatprep.subr.mxu0 0.0
    %873 = vmatpush2.msra.mxu0 0.0
    %874 = vmatprep.subr.mxu0 0.0
    %875 = vmatpush2.msra.mxu0 0.0
    %876 = vmatprep.subr.mxu0 0.0
    %877 = vmatpush2.msra.mxu0 0.0
    %878 = vmatprep.subr.mxu0 0.0
    %879 = vmatpush2.msra.mxu0 0.0
    %880 = vmatprep.subr.mxu0 0.0
    %881 = vmatpush2.msra.mxu0 0.0
    %882 = vmatprep.subr.mxu0 0.0
    %883 = vmatpush2.msra.mxu0 0.0
    %884 = vmatprep.subr.mxu0 0.0
    %885 = vmatpush2.msra.mxu0 0.0
    %886 = vmatprep.subr.mxu0 0.0
    %887 = vmatpush2.msra.mxu0 0.0
    %888 = vmatprep.subr.mxu0 0.0
    %889 = vmatpush2.msra.mxu0 0.0
    %890 = vmatprep.mubr.f32.mxu0 0.0
    %891 = vmatmul.mubr.f32.gmra.mxu0 %v824
    %v892 = vpop.f32.mrf.mxu0
    %v893 = vadd.f32 0.0, %v892
    %v894 = vpop.f32.mrf.mxu0
    %895 = vdwg.mxu0
    %v897 = vrot.slane %v893, 3
    %v898 = vrot.slane %v893, 4
    %v901 = vadd.f32 %v120, %v897
    %v902 = vadd.f32 %v125, %v898
    %v903 = vxor.u32 %v901, 2147483648
    %v904 = vxor.u32 %v902, 2147483648
    %v905 = vmul.f32 %v903, 1.442695
    %v906 = vpow.pop %v905
    %v907 = vmul.f32 %v904, 1.442695
    %v908 = vpow.pop %v907
    %v909 = vadd.f32 %v906, 1.0
    %v910 = vadd.f32 %v908, 1.0
    %v911 = vrcp.pop %v909
    %v912 = vmul.f32 1.0, %v911
    %v913 = vrcp.pop %v910
    %v914 = vmul.f32 1.0, %v913
    %v915 = vtanh.pop %v901
    %v916 = vtanh.pop %v902
    %v919 = vrot.slane %v803, 7
    %v920 = vrot.slane %v804, 7
    %v923 = vmul.f32 %v912, %v919
    %v924 = vmul.f32 %v914, %v920
    %927 = vrot.lane.b32.xlu0 %v915, 64
    %v928 = vpop.permute.xlu0 %927
    %929 = vrot.lane.b32.xlu0 %v916, 64
    %v930 = vpop.permute.xlu0 %929
    %v933 = vmul.f32 %v912, %v928
    %v934 = vmul.f32 %v914, %v930
    %937 = vrot.lane.b32.xlu0 %v933, 32
    %v938 = vpop.permute.xlu0 %937
    %939 = vrot.lane.b32.xlu0 %v934, 32
    %v940 = vpop.permute.xlu0 %939
    %v943 = vadd.f32 %v923, %v938
    %v944 = vadd.f32 %v924, %v940
    %v945 = vtanh.pop %v943
    %v946 = vtanh.pop %v944
    %949 = vrot.lane.b32.xlu0 %v945, 64
    %v950 = vpop.permute.xlu0 %949
    %951 = vrot.lane.b32.xlu0 %v946, 64
    %v952 = vpop.permute.xlu0 %951
    %v955 = vmul.f32 %v912, %v950
    %v956 = vmul.f32 %v914, %v952
    %v959 = vrot.slane %v955, 5
    %v960 = vrot.slane %v956, 4
    %v961 = vsel %vm262, %v960, %v959
    %962 = vrot.lane.b32.xlu0 %v961, 32
    %v963 = vpop.permute.xlu0 %962
    %v964 = vsel %vm46, %v963, 0
    %966 = vmatprep.subr.mxu0 0.0
    %967 = vmatpush1.msra.mxu0 0.0
    %968 = vmatprep.subr.mxu0 0.0
    %969 = vmatpush1.msra.mxu0 0.0
    %970 = vmatprep.subr.mxu0 0.0
    %971 = vmatpush1.msra.mxu0 0.0
    %972 = vmatprep.subr.mxu0 0.0
    %973 = vmatpush1.msra.mxu0 0.0
    %974 = vmatprep.subr.mxu0 0.0
    %975 = vmatpush1.msra.mxu0 0.0
    %976 = vmatprep.subr.mxu0 0.0
    %977 = vmatpush1.msra.mxu0 0.0
    %978 = vmatprep.subr.mxu0 0.0
    %979 = vmatpush1.msra.mxu0 0.0
    %980 = vmatprep.subr.mxu0 0.0
    %981 = vmatpush1.msra.mxu0 0.0
    %982 = vmatprep.subr.mxu0 0.0
    %983 = vmatpush1.msra.mxu0 0.0
    %984 = vmatprep.subr.mxu0 0.0
    %985 = vmatpush1.msra.mxu0 0.0
    %986 = vmatprep.subr.mxu0 0.0
    %987 = vmatpush1.msra.mxu0 0.0
    %988 = vmatprep.subr.mxu0 0.0
    %989 = vmatpush1.msra.mxu0 0.0
    %990 = vmatprep.subr.mxu0 0.0
    %991 = vmatpush1.msra.mxu0 %v131
    %992 = vmatprep.subr.mxu0 0.0
    %993 = vmatpush1.msra.mxu0 %v130
    %994 = vmatprep.subr.mxu0 0.0
    %995 = vmatpush1.msra.mxu0 %v129
    %996 = vmatprep.subr.mxu0 0.0
    %997 = vmatpush1.msra.mxu0 %v128
    %998 = vmatprep.subr.mxu0 0.0
    %999 = vmatpush2.msra.mxu0 0.0
    %1000 = vmatprep.subr.mxu0 0.0
    %1001 = vmatpush2.msra.mxu0 0.0
    %1002 = vmatprep.subr.mxu0 0.0
    %1003 = vmatpush2.msra.mxu0 0.0
    %1004 = vmatprep.subr.mxu0 0.0
    %1005 = vmatpush2.msra.mxu0 0.0
    %1006 = vmatprep.subr.mxu0 0.0
    %1007 = vmatpush2.msra.mxu0 0.0
    %1008 = vmatprep.subr.mxu0 0.0
    %1009 = vmatpush2.msra.mxu0 0.0
    %1010 = vmatprep.subr.mxu0 0.0
    %1011 = vmatpush2.msra.mxu0 0.0
    %1012 = vmatprep.subr.mxu0 0.0
    %1013 = vmatpush2.msra.mxu0 0.0
    %1014 = vmatprep.subr.mxu0 0.0
    %1015 = vmatpush2.msra.mxu0 0.0
    %1016 = vmatprep.subr.mxu0 0.0
    %1017 = vmatpush2.msra.mxu0 0.0
    %1018 = vmatprep.subr.mxu0 0.0
    %1019 = vmatpush2.msra.mxu0 0.0
    %1020 = vmatprep.subr.mxu0 0.0
    %1021 = vmatpush2.msra.mxu0 0.0
    %1022 = vmatprep.subr.mxu0 0.0
    %1023 = vmatpush2.msra.mxu0 0.0
    %1024 = vmatprep.subr.mxu0 0.0
    %1025 = vmatpush2.msra.mxu0 0.0
    %1026 = vmatprep.subr.mxu0 0.0
    %1027 = vmatpush2.msra.mxu0 0.0
    %1028 = vmatprep.subr.mxu0 0.0
    %1029 = vmatpush2.msra.mxu0 0.0
    %1030 = vmatprep.mubr.f32.mxu0 0.0
    %1031 = vmatmul.mubr.f32.gmra.mxu0 %v964
    %v1032 = vpop.f32.mrf.mxu0
    %v1033 = vadd.f32 0.0, %v1032
    %v1034 = vpop.f32.mrf.mxu0
    %1035 = vdwg.mxu0
    %v1037 = vrot.slane %v1033, 2
    %v1038 = vrot.slane %v1033, 3
    %v1041 = vadd.f32 %v120, %v1037
    %v1042 = vadd.f32 %v125, %v1038
    %v1043 = vxor.u32 %v1041, 2147483648
    %v1044 = vxor.u32 %v1042, 2147483648
    %v1045 = vmul.f32 %v1043, 1.442695
    %v1046 = vpow.pop %v1045
    %v1047 = vmul.f32 %v1044, 1.442695
    %v1048 = vpow.pop %v1047
    %v1049 = vadd.f32 %v1046, 1.0
    %v1050 = vadd.f32 %v1048, 1.0
    %v1051 = vrcp.pop %v1049
    %v1052 = vmul.f32 1.0, %v1051
    %v1053 = vrcp.pop %v1050
    %v1054 = vmul.f32 1.0, %v1053
    %v1055 = vtanh.pop %v1041
    %v1056 = vtanh.pop %v1042
    %v1059 = vrot.slane %v943, 7
    %v1060 = vrot.slane %v944, 7
    %v1063 = vmul.f32 %v1052, %v1059
    %v1064 = vmul.f32 %v1054, %v1060
    %1067 = vrot.lane.b32.xlu0 %v1055, 64
    %v1068 = vpop.permute.xlu0 %1067
    %1069 = vrot.lane.b32.xlu0 %v1056, 64
    %v1070 = vpop.permute.xlu0 %1069
    %v1073 = vmul.f32 %v1052, %v1068
    %v1074 = vmul.f32 %v1054, %v1070
    %1077 = vrot.lane.b32.xlu0 %v1073, 32
    %v1078 = vpop.permute.xlu0 %1077
    %1079 = vrot.lane.b32.xlu0 %v1074, 32
    %v1080 = vpop.permute.xlu0 %1079
    %v1083 = vadd.f32 %v1063, %v1078
    %v1084 = vadd.f32 %v1064, %v1080
    %v1085 = vtanh.pop %v1083
    %v1086 = vtanh.pop %v1084
    %1089 = vrot.lane.b32.xlu0 %v1085, 64
    %v1090 = vpop.permute.xlu0 %1089
    %1091 = vrot.lane.b32.xlu0 %v1086, 64
    %v1092 = vpop.permute.xlu0 %1091
    %v1095 = vmul.f32 %v1052, %v1090
    %v1096 = vmul.f32 %v1054, %v1092
    %v1099 = vrot.slane %v1095, 6
    %v1100 = vrot.slane %v1096, 5
    %v1101 = vsel %vm262, %v1100, %v1099
    %1102 = vrot.lane.b32.xlu0 %v1101, 32
    %v1103 = vpop.permute.xlu0 %1102
    %v1104 = vsel %vm46, %v1103, 0
    %1106 = vmatprep.subr.mxu0 0.0
    %1107 = vmatpush1.msra.mxu0 0.0
    %1108 = vmatprep.subr.mxu0 0.0
    %1109 = vmatpush1.msra.mxu0 0.0
    %1110 = vmatprep.subr.mxu0 0.0
    %1111 = vmatpush1.msra.mxu0 0.0
    %1112 = vmatprep.subr.mxu0 0.0
    %1113 = vmatpush1.msra.mxu0 0.0
    %1114 = vmatprep.subr.mxu0 0.0
    %1115 = vmatpush1.msra.mxu0 0.0
    %1116 = vmatprep.subr.mxu0 0.0
    %1117 = vmatpush1.msra.mxu0 0.0
    %1118 = vmatprep.subr.mxu0 0.0
    %1119 = vmatpush1.msra.mxu0 0.0
    %1120 = vmatprep.subr.mxu0 0.0
    %1121 = vmatpush1.msra.mxu0 0.0
    %1122 = vmatprep.subr.mxu0 0.0
    %1123 = vmatpush1.msra.mxu0 0.0
    %1124 = vmatprep.subr.mxu0 0.0
    %1125 = vmatpush1.msra.mxu0 0.0
    %1126 = vmatprep.subr.mxu0 0.0
    %1127 = vmatpush1.msra.mxu0 0.0
    %1128 = vmatprep.subr.mxu0 0.0
    %1129 = vmatpush1.msra.mxu0 0.0
    %1130 = vmatprep.subr.mxu0 0.0
    %1131 = vmatpush1.msra.mxu0 %v131
    %1132 = vmatprep.subr.mxu0 0.0
    %1133 = vmatpush1.msra.mxu0 %v130
    %1134 = vmatprep.subr.mxu0 0.0
    %1135 = vmatpush1.msra.mxu0 %v129
    %1136 = vmatprep.subr.mxu0 0.0
    %1137 = vmatpush1.msra.mxu0 %v128
    %1138 = vmatprep.subr.mxu0 0.0
    %1139 = vmatpush2.msra.mxu0 0.0
    %1140 = vmatprep.subr.mxu0 0.0
    %1141 = vmatpush2.msra.mxu0 0.0
    %1142 = vmatprep.subr.mxu0 0.0
    %1143 = vmatpush2.msra.mxu0 0.0
    %1144 = vmatprep.subr.mxu0 0.0
    %1145 = vmatpush2.msra.mxu0 0.0
    %1146 = vmatprep.subr.mxu0 0.0
    %1147 = vmatpush2.msra.mxu0 0.0
    %1148 = vmatprep.subr.mxu0 0.0
    %1149 = vmatpush2.msra.mxu0 0.0
    %1150 = vmatprep.subr.mxu0 0.0
    %1151 = vmatpush2.msra.mxu0 0.0
    %1152 = vmatprep.subr.mxu0 0.0
    %1153 = vmatpush2.msra.mxu0 0.0
    %1154 = vmatprep.subr.mxu0 0.0
    %1155 = vmatpush2.msra.mxu0 0.0
    %1156 = vmatprep.subr.mxu0 0.0
    %1157 = vmatpush2.msra.mxu0 0.0
    %1158 = vmatprep.subr.mxu0 0.0
    %1159 = vmatpush2.msra.mxu0 0.0
    %1160 = vmatprep.subr.mxu0 0.0
    %1161 = vmatpush2.msra.mxu0 0.0
    %1162 = vmatprep.subr.mxu0 0.0
    %1163 = vmatpush2.msra.mxu0 0.0
    %1164 = vmatprep.subr.mxu0 0.0
    %1165 = vmatpush2.msra.mxu0 0.0
    %1166 = vmatprep.subr.mxu0 0.0
    %1167 = vmatpush2.msra.mxu0 0.0
    %1168 = vmatprep.subr.mxu0 0.0
    %1169 = vmatpush2.msra.mxu0 0.0
    %1170 = vmatprep.mubr.f32.mxu0 0.0
    %1171 = vmatmul.mubr.f32.gmra.mxu0 %v1104
    %v1172 = vpop.f32.mrf.mxu0
    %v1173 = vadd.f32 0.0, %v1172
    %v1174 = vpop.f32.mrf.mxu0
    %1175 = vdwg.mxu0
    %v1177 = vrot.slane %v1173, 1
    %v1178 = vrot.slane %v1173, 2
    %v1181 = vadd.f32 %v120, %v1177
    %v1182 = vadd.f32 %v125, %v1178
    %v1183 = vxor.u32 %v1181, 2147483648
    %v1184 = vxor.u32 %v1182, 2147483648
    %v1185 = vmul.f32 %v1183, 1.442695
    %v1186 = vpow.pop %v1185
    %v1187 = vmul.f32 %v1184, 1.442695
    %v1188 = vpow.pop %v1187
    %v1189 = vadd.f32 %v1186, 1.0
    %v1190 = vadd.f32 %v1188, 1.0
    %v1191 = vrcp.pop %v1189
    %v1192 = vmul.f32 1.0, %v1191
    %v1193 = vrcp.pop %v1190
    %v1194 = vmul.f32 1.0, %v1193
    %v1195 = vtanh.pop %v1181
    %v1196 = vtanh.pop %v1182
    %v1199 = vrot.slane %v1083, 7
    %v1200 = vrot.slane %v1084, 7
    %v1203 = vmul.f32 %v1192, %v1199
    %v1204 = vmul.f32 %v1194, %v1200
    %1207 = vrot.lane.b32.xlu0 %v1195, 64
    %v1208 = vpop.permute.xlu0 %1207
    %1209 = vrot.lane.b32.xlu0 %v1196, 64
    %v1210 = vpop.permute.xlu0 %1209
    %v1213 = vmul.f32 %v1192, %v1208
    %v1214 = vmul.f32 %v1194, %v1210
    %1217 = vrot.lane.b32.xlu0 %v1213, 32
    %v1218 = vpop.permute.xlu0 %1217
    %1219 = vrot.lane.b32.xlu0 %v1214, 32
    %v1220 = vpop.permute.xlu0 %1219
    %v1223 = vadd.f32 %v1203, %v1218
    %v1224 = vadd.f32 %v1204, %v1220
    %v1225 = vtanh.pop %v1223
    %v1226 = vtanh.pop %v1224
    %1229 = vrot.lane.b32.xlu0 %v1225, 64
    %v1230 = vpop.permute.xlu0 %1229
    %1231 = vrot.lane.b32.xlu0 %v1226, 64
    %v1232 = vpop.permute.xlu0 %1231
    %v1235 = vmul.f32 %v1192, %v1230
    %v1236 = vmul.f32 %v1194, %v1232
    %vm1237 = vcmask 1040384
    %v1238 = vsel %vm1237, %v257, %v396
    %v1239 = vsel %vm1237, %v258, %v397
    %vm1240 = vcmask 1041408
    %v1241 = vsel %vm1240, %v1238, %v535
    %v1242 = vsel %vm1240, %v1239, %v536
    %vm1243 = vcmask 1042432
    %v1244 = vsel %vm1243, %v1241, %v675
    %v1245 = vsel %vm1243, %v1242, %v676
    %vm1246 = vcmask 1043456
    %v1247 = vsel %vm1246, %v1244, %v815
    %v1248 = vsel %vm1246, %v1245, %v816
    %vm1249 = vcmask 1044480
    %v1250 = vsel %vm1249, %v1247, %v955
    %v1251 = vsel %vm1249, %v1248, %v956
    %vm1252 = vcmask 1045504
    %v1253 = vsel %vm1252, %v1250, %v1095
    %v1254 = vsel %vm1252, %v1251, %v1096
    %vm1255 = vcmask 1046528
    %v1256 = vsel %vm1255, %v1253, %v1235
    %v1257 = vsel %vm1255, %v1254, %v1236
    %v1258 = vld [vmem:[%s2] sm:$0xff]
    %v1259 = vld [vmem:[%s2 + $0x8] sm:$0xff]
    %v1260 = vld [vmem:[%s2 + $0x10] sm:$0xff]
    %v1261 = vld [vmem:[%s2 + $0x18] sm:$0xff]
    %v1262 = vld [vmem:[%s2 + $0x20] sm:$0xff]
    %v1263 = vld [vmem:[%s2 + $0x28] sm:$0xff]
    %v1264 = vld [vmem:[%s2 + $0x30] sm:$0xff]
    %v1265 = vld [vmem:[%s2 + $0x38] sm:$0xf]
    %v1266 = vld [vmem:[%s2 + $0x40] sm:$0xff]
    %v1267 = vld [vmem:[%s2 + $0x48] sm:$0xff]
    %v1268 = vld [vmem:[%s2 + $0x50] sm:$0xff]
    %v1269 = vld [vmem:[%s2 + $0x58] sm:$0xff]
    %v1270 = vld [vmem:[%s2 + $0x60] sm:$0xff]
    %v1271 = vld [vmem:[%s2 + $0x68] sm:$0xff]
    %v1272 = vld [vmem:[%s2 + $0x70] sm:$0xff]
    %v1273 = vld [vmem:[%s2 + $0x78] sm:$0xf]
    %v1274 = vld [vmem:[%s0] sm:$0x3]
    %v1275 = vlaneseq
    %v1276 = vand.u32 %v1275, 127
    %v1278 = vunpack.c.l.s4 1966171168
    %v1279 = vunpack.c.0.s8 %v1278
    %v1280 = vlaneseq
    %v1281 = vshrl.u32 %v1280, 7
    %v1282 = vsub.s32 %v1279, %v1281
    %v1283 = vrot.slane %v1274, %v1282
    %v1284 = vcombine.high %v1283, %v1283
    %v1286 = vunpack.c.l.s4 1966171168
    %v1287 = vunpack.c.0.s8 %v1286
    %v1288 = vlaneseq
    %v1289 = vshrl.u32 %v1288, 7
    %v1290 = vsub.s32 %v1287, %v1289
    %v1291 = vrot.slane %v1283, %v1290
    %v1293 = vunpack.c.l.s4 1966171168
    %v1294 = vunpack.c.0.s8 %v1293
    %v1295 = vlaneseq
    %v1296 = vshrl.u32 %v1295, 7
    %v1297 = vsub.s32 %v1294, %v1296
    %v1298 = vrot.slane %v1284, %v1297
    %1299 = vset.pattern.permute.xlu0 0
    %1300 = vperm.xlu0 %1299, %v1291
    %v1301 = vpop.permute.xlu0 %1300
    %v1302 = vlaneseq
    %v1303 = vshrl.u32 %v1302, 7
    %v1304 = vsub.s32 0, %v1303
    %v1305 = vrot.slane %v1301, %v1304
    %1306 = vset.pattern.permute.xlu0 0
    %1307 = vperm.xlu0 %1306, %v1298
    %v1308 = vpop.permute.xlu0 %1307
    %v1309 = vlaneseq
    %v1310 = vshrl.u32 %v1309, 7
    %v1311 = vsub.s32 0, %v1310
    %v1312 = vrot.slane %v1308, %v1311
    %vm1313 = vcmp.lt.s32.totalorder %v1276, %v1305
    %vm1314 = vcmp.lt.s32.totalorder %v1276, %v1312
    %v1315 = vsel %vm1313, 0.0, -1e+09
    %v1316 = vsel %vm1314, 0.0, -1e+09
    %1318 = vrot.lane.b32.xlu0 %v1256, 32
    %v1319 = vpop.permute.xlu0 %1318
    %v1320 = vsel %vm46, %v1319, 0
    %v1323 = vsel %vm46, %v1258, 0
    %v1326 = vsel %vm46, %v1259, 0
    %v1329 = vsel %vm46, %v1260, 0
    %v1332 = vsel %vm46, %v1261, 0
    %v1335 = vsel %vm46, %v1262, 0
    %v1338 = vsel %vm46, %v1263, 0
    %v1341 = vsel %vm46, %v1264, 0
    %v1344 = vsel %vm46, %v1265, 0
    %1346 = vmatprep.subr.mxu0 0.0
    %1347 = vmatpush1.xpose.msra.mxu0 0.0
    %1348 = vmatprep.subr.mxu0 0.0
    %1349 = vmatpush1.xpose.msra.mxu0 0.0
    %1350 = vmatprep.subr.mxu0 0.0
    %1351 = vmatpush1.xpose.msra.mxu0 0.0
    %1352 = vmatprep.subr.mxu0 0.0
    %1353 = vmatpush1.xpose.msra.mxu0 0.0
    %1354 = vmatprep.subr.mxu0 0.0
    %1355 = vmatpush1.xpose.msra.mxu0 0.0
    %1356 = vmatprep.subr.mxu0 0.0
    %1357 = vmatpush1.xpose.msra.mxu0 0.0
    %1358 = vmatprep.subr.mxu0 0.0
    %1359 = vmatpush1.xpose.msra.mxu0 0.0
    %1360 = vmatprep.subr.mxu0 0.0
    %1361 = vmatpush1.xpose.msra.mxu0 0.0
    %1362 = vmatprep.subr.mxu0 0.0
    %1363 = vmatpush1.xpose.msra.mxu0 %v1344
    %1364 = vmatprep.subr.mxu0 0.0
    %1365 = vmatpush1.xpose.msra.mxu0 %v1341
    %1366 = vmatprep.subr.mxu0 0.0
    %1367 = vmatpush1.xpose.msra.mxu0 %v1338
    %1368 = vmatprep.subr.mxu0 0.0
    %1369 = vmatpush1.xpose.msra.mxu0 %v1335
    %1370 = vmatprep.subr.mxu0 0.0
    %1371 = vmatpush1.xpose.msra.mxu0 %v1332
    %1372 = vmatprep.subr.mxu0 0.0
    %1373 = vmatpush1.xpose.msra.mxu0 %v1329
    %1374 = vmatprep.subr.mxu0 0.0
    %1375 = vmatpush1.xpose.msra.mxu0 %v1326
    %1376 = vmatprep.subr.mxu0 0.0
    %1377 = vmatpush1.xpose.msra.mxu0 %v1323
    %1378 = vmatprep.subr.mxu0 0.0
    %1379 = vmatpush2.xpose.msra.mxu0 0.0
    %1380 = vmatprep.subr.mxu0 0.0
    %1381 = vmatpush2.xpose.msra.mxu0 0.0
    %1382 = vmatprep.subr.mxu0 0.0
    %1383 = vmatpush2.xpose.msra.mxu0 0.0
    %1384 = vmatprep.subr.mxu0 0.0
    %1385 = vmatpush2.xpose.msra.mxu0 0.0
    %1386 = vmatprep.subr.mxu0 0.0
    %1387 = vmatpush2.xpose.msra.mxu0 0.0
    %1388 = vmatprep.subr.mxu0 0.0
    %1389 = vmatpush2.xpose.msra.mxu0 0.0
    %1390 = vmatprep.subr.mxu0 0.0
    %1391 = vmatpush2.xpose.msra.mxu0 0.0
    %1392 = vmatprep.subr.mxu0 0.0
    %1393 = vmatpush2.xpose.msra.mxu0 0.0
    %1394 = vmatprep.subr.mxu0 0.0
    %1395 = vmatpush2.xpose.msra.mxu0 0.0
    %1396 = vmatprep.subr.mxu0 0.0
    %1397 = vmatpush2.xpose.msra.mxu0 0.0
    %1398 = vmatprep.subr.mxu0 0.0
    %1399 = vmatpush2.xpose.msra.mxu0 0.0
    %1400 = vmatprep.subr.mxu0 0.0
    %1401 = vmatpush2.xpose.msra.mxu0 0.0
    %1402 = vmatprep.subr.mxu0 0.0
    %1403 = vmatpush2.xpose.msra.mxu0 0.0
    %1404 = vmatprep.subr.mxu0 0.0
    %1405 = vmatpush2.xpose.msra.mxu0 0.0
    %1406 = vmatprep.subr.mxu0 0.0
    %1407 = vmatpush2.xpose.msra.mxu0 0.0
    %1408 = vmatprep.subr.mxu0 0.0
    %1409 = vmatpush2.xpose.msra.mxu0 0.0
    %1410 = vmatprep.mubr.f32.mxu0 0.0
    %1411 = vmatmul.mubr.f32.gmra.mxu0 %v1320
    %v1412 = vpop.f32.mrf.mxu0
    %v1413 = vadd.f32 %v1315, %v1412
    %v1414 = vpop.f32.mrf.mxu0
    %1415 = vdwg.mxu0
    %1417 = vrot.lane.b32.xlu0 %v1257, 32
    %v1418 = vpop.permute.xlu0 %1417
    %v1419 = vsel %vm46, %v1418, 0
    %v1422 = vsel %vm46, %v1266, 0
    %v1425 = vsel %vm46, %v1267, 0
    %v1428 = vsel %vm46, %v1268, 0
    %v1431 = vsel %vm46, %v1269, 0
    %v1434 = vsel %vm46, %v1270, 0
    %v1437 = vsel %vm46, %v1271, 0
    %v1440 = vsel %vm46, %v1272, 0
    %v1443 = vsel %vm46, %v1273, 0
    %1445 = vmatprep.subr.mxu0 0.0
    %1446 = vmatpush1.xpose.msra.mxu0 0.0
    %1447 = vmatprep.subr.mxu0 0.0
    %1448 = vmatpush1.xpose.msra.mxu0 0.0
    %1449 = vmatprep.subr.mxu0 0.0
    %1450 = vmatpush1.xpose.msra.mxu0 0.0
    %1451 = vmatprep.subr.mxu0 0.0
    %1452 = vmatpush1.xpose.msra.mxu0 0.0
    %1453 = vmatprep.subr.mxu0 0.0
    %1454 = vmatpush1.xpose.msra.mxu0 0.0
    %1455 = vmatprep.subr.mxu0 0.0
    %1456 = vmatpush1.xpose.msra.mxu0 0.0
    %1457 = vmatprep.subr.mxu0 0.0
    %1458 = vmatpush1.xpose.msra.mxu0 0.0
    %1459 = vmatprep.subr.mxu0 0.0
    %1460 = vmatpush1.xpose.msra.mxu0 0.0
    %1461 = vmatprep.subr.mxu0 0.0
    %1462 = vmatpush1.xpose.msra.mxu0 %v1443
    %1463 = vmatprep.subr.mxu0 0.0
    %1464 = vmatpush1.xpose.msra.mxu0 %v1440
    %1465 = vmatprep.subr.mxu0 0.0
    %1466 = vmatpush1.xpose.msra.mxu0 %v1437
    %1467 = vmatprep.subr.mxu0 0.0
    %1468 = vmatpush1.xpose.msra.mxu0 %v1434
    %1469 = vmatprep.subr.mxu0 0.0
    %1470 = vmatpush1.xpose.msra.mxu0 %v1431
    %1471 = vmatprep.subr.mxu0 0.0
    %1472 = vmatpush1.xpose.msra.mxu0 %v1428
    %1473 = vmatprep.subr.mxu0 0.0
    %1474 = vmatpush1.xpose.msra.mxu0 %v1425
    %1475 = vmatprep.subr.mxu0 0.0
    %1476 = vmatpush1.xpose.msra.mxu0 %v1422
    %1477 = vmatprep.subr.mxu0 0.0
    %1478 = vmatpush2.xpose.msra.mxu0 0.0
    %1479 = vmatprep.subr.mxu0 0.0
    %1480 = vmatpush2.xpose.msra.mxu0 0.0
    %1481 = vmatprep.subr.mxu0 0.0
    %1482 = vmatpush2.xpose.msra.mxu0 0.0
    %1483 = vmatprep.subr.mxu0 0.0
    %1484 = vmatpush2.xpose.msra.mxu0 0.0
    %1485 = vmatprep.subr.mxu0 0.0
    %1486 = vmatpush2.xpose.msra.mxu0 0.0
    %1487 = vmatprep.subr.mxu0 0.0
    %1488 = vmatpush2.xpose.msra.mxu0 0.0
    %1489 = vmatprep.subr.mxu0 0.0
    %1490 = vmatpush2.xpose.msra.mxu0 0.0
    %1491 = vmatprep.subr.mxu0 0.0
    %1492 = vmatpush2.xpose.msra.mxu0 0.0
    %1493 = vmatprep.subr.mxu0 0.0
    %1494 = vmatpush2.xpose.msra.mxu0 0.0
    %1495 = vmatprep.subr.mxu0 0.0
    %1496 = vmatpush2.xpose.msra.mxu0 0.0
    %1497 = vmatprep.subr.mxu0 0.0
    %1498 = vmatpush2.xpose.msra.mxu0 0.0
    %1499 = vmatprep.subr.mxu0 0.0
    %1500 = vmatpush2.xpose.msra.mxu0 0.0
    %1501 = vmatprep.subr.mxu0 0.0
    %1502 = vmatpush2.xpose.msra.mxu0 0.0
    %1503 = vmatprep.subr.mxu0 0.0
    %1504 = vmatpush2.xpose.msra.mxu0 0.0
    %1505 = vmatprep.subr.mxu0 0.0
    %1506 = vmatpush2.xpose.msra.mxu0 0.0
    %1507 = vmatprep.subr.mxu0 0.0
    %1508 = vmatpush2.xpose.msra.mxu0 0.0
    %1509 = vmatprep.mubr.f32.mxu0 0.0
    %1510 = vmatmul.mubr.f32.gmra.mxu0 %v1419
    %v1511 = vpop.f32.mrf.mxu0
    %v1512 = vadd.f32 %v1316, %v1511
    %v1513 = vpop.f32.mrf.mxu0
    %1514 = vdwg.mxu0
    %vm1515 = vcmask 490496
    %v1516 = vsel %vm1515, %v1413, -inf
    %1517 = vmax.xlane.f32.xlu0 %v1516
    %v1518 = vpop.xlane.xlu0 %1517
    %v1519 = vsel %vm1515, %v1512, -inf
    %1520 = vmax.xlane.f32.xlu0 %v1519
    %v1521 = vpop.xlane.xlu0 %1520
    %v1522 = vsub.f32 %v1413, %v1518
    %v1523 = vsub.f32 %v1512, %v1521
    %v1524 = vmul.f32 %v1522, 1.442695
    %v1525 = vpow.pop %v1524
    %v1526 = vmul.f32 %v1523, 1.442695
    %v1527 = vpow.pop %v1526
    %v1528 = vsel %vm1515, %v1525, 0.0
    %1529 = vadd.xlane.f32.xlu0 %v1528
    %v1530 = vpop.xlane.xlu0 %1529
    %v1531 = vsel %vm1515, %v1527, 0.0
    %1532 = vadd.xlane.f32.xlu0 %v1531
    %v1533 = vpop.xlane.xlu0 %1532
    %v1534 = vrcp.pop %v1530
    %v1535 = vmul.f32 %v1525, %v1534
    %v1536 = vrcp.pop %v1533
    %v1537 = vmul.f32 %v1527, %v1536
    %v1539 = vsel %vm1515, %v1535, 0
    %v1541 = vsel %vm1246, %v1265, 0
    %1543 = vmatprep.subr.mxu0 0.0
    %1544 = vmatpush1.msra.mxu0 0.0
    %1545 = vmatprep.subr.mxu0 0.0
    %1546 = vmatpush1.msra.mxu0 0.0
    %1547 = vmatprep.subr.mxu0 0.0
    %1548 = vmatpush1.msra.mxu0 0.0
    %1549 = vmatprep.subr.mxu0 0.0
    %1550 = vmatpush1.msra.mxu0 0.0
    %1551 = vmatprep.subr.mxu0 0.0
    %1552 = vmatpush1.msra.mxu0 0.0
    %1553 = vmatprep.subr.mxu0 0.0
    %1554 = vmatpush1.msra.mxu0 0.0
    %1555 = vmatprep.subr.mxu0 0.0
    %1556 = vmatpush1.msra.mxu0 0.0
    %1557 = vmatprep.subr.mxu0 0.0
    %1558 = vmatpush1.msra.mxu0 0.0
    %1559 = vmatprep.subr.mxu0 0.0
    %1560 = vmatpush1.msra.mxu0 %v1541
    %1561 = vmatprep.subr.mxu0 0.0
    %1562 = vmatpush1.msra.mxu0 %v1264
    %1563 = vmatprep.subr.mxu0 0.0
    %1564 = vmatpush1.msra.mxu0 %v1263
    %1565 = vmatprep.subr.mxu0 0.0
    %1566 = vmatpush1.msra.mxu0 %v1262
    %1567 = vmatprep.subr.mxu0 0.0
    %1568 = vmatpush1.msra.mxu0 %v1261
    %1569 = vmatprep.subr.mxu0 0.0
    %1570 = vmatpush1.msra.mxu0 %v1260
    %1571 = vmatprep.subr.mxu0 0.0
    %1572 = vmatpush1.msra.mxu0 %v1259
    %1573 = vmatprep.subr.mxu0 0.0
    %1574 = vmatpush1.msra.mxu0 %v1258
    %1575 = vmatprep.subr.mxu0 0.0
    %1576 = vmatpush2.msra.mxu0 0.0
    %1577 = vmatprep.subr.mxu0 0.0
    %1578 = vmatpush2.msra.mxu0 0.0
    %1579 = vmatprep.subr.mxu0 0.0
    %1580 = vmatpush2.msra.mxu0 0.0
    %1581 = vmatprep.subr.mxu0 0.0
    %1582 = vmatpush2.msra.mxu0 0.0
    %1583 = vmatprep.subr.mxu0 0.0
    %1584 = vmatpush2.msra.mxu0 0.0
    %1585 = vmatprep.subr.mxu0 0.0
    %1586 = vmatpush2.msra.mxu0 0.0
    %1587 = vmatprep.subr.mxu0 0.0
    %1588 = vmatpush2.msra.mxu0 0.0
    %1589 = vmatprep.subr.mxu0 0.0
    %1590 = vmatpush2.msra.mxu0 0.0
    %1591 = vmatprep.subr.mxu0 0.0
    %1592 = vmatpush2.msra.mxu0 0.0
    %1593 = vmatprep.subr.mxu0 0.0
    %1594 = vmatpush2.msra.mxu0 0.0
    %1595 = vmatprep.subr.mxu0 0.0
    %1596 = vmatpush2.msra.mxu0 0.0
    %1597 = vmatprep.subr.mxu0 0.0
    %1598 = vmatpush2.msra.mxu0 0.0
    %1599 = vmatprep.subr.mxu0 0.0
    %1600 = vmatpush2.msra.mxu0 0.0
    %1601 = vmatprep.subr.mxu0 0.0
    %1602 = vmatpush2.msra.mxu0 0.0
    %1603 = vmatprep.subr.mxu0 0.0
    %1604 = vmatpush2.msra.mxu0 0.0
    %1605 = vmatprep.subr.mxu0 0.0
    %1606 = vmatpush2.msra.mxu0 0.0
    %1607 = vmatprep.mubr.f32.mxu0 0.0
    %1608 = vmatmul.mubr.f32.gmra.mxu0 %v1539
    %v1609 = vpop.f32.mrf.mxu0
    %v1610 = vadd.f32 0.0, %v1609
    %v1611 = vpop.f32.mrf.mxu0
    %1612 = vdwg.mxu0
    %v1614 = vsel %vm1515, %v1537, 0
    %v1616 = vsel %vm1246, %v1273, 0
    %1618 = vmatprep.subr.mxu0 0.0
    %1619 = vmatpush1.msra.mxu0 0.0
    %1620 = vmatprep.subr.mxu0 0.0
    %1621 = vmatpush1.msra.mxu0 0.0
    %1622 = vmatprep.subr.mxu0 0.0
    %1623 = vmatpush1.msra.mxu0 0.0
    %1624 = vmatprep.subr.mxu0 0.0
    %1625 = vmatpush1.msra.mxu0 0.0
    %1626 = vmatprep.subr.mxu0 0.0
    %1627 = vmatpush1.msra.mxu0 0.0
    %1628 = vmatprep.subr.mxu0 0.0
    %1629 = vmatpush1.msra.mxu0 0.0
    %1630 = vmatprep.subr.mxu0 0.0
    %1631 = vmatpush1.msra.mxu0 0.0
    %1632 = vmatprep.subr.mxu0 0.0
    %1633 = vmatpush1.msra.mxu0 0.0
    %1634 = vmatprep.subr.mxu0 0.0
    %1635 = vmatpush1.msra.mxu0 %v1616
    %1636 = vmatprep.subr.mxu0 0.0
    %1637 = vmatpush1.msra.mxu0 %v1272
    %1638 = vmatprep.subr.mxu0 0.0
    %1639 = vmatpush1.msra.mxu0 %v1271
    %1640 = vmatprep.subr.mxu0 0.0
    %1641 = vmatpush1.msra.mxu0 %v1270
    %1642 = vmatprep.subr.mxu0 0.0
    %1643 = vmatpush1.msra.mxu0 %v1269
    %1644 = vmatprep.subr.mxu0 0.0
    %1645 = vmatpush1.msra.mxu0 %v1268
    %1646 = vmatprep.subr.mxu0 0.0
    %1647 = vmatpush1.msra.mxu0 %v1267
    %1648 = vmatprep.subr.mxu0 0.0
    %1649 = vmatpush1.msra.mxu0 %v1266
    %1650 = vmatprep.subr.mxu0 0.0
    %1651 = vmatpush2.msra.mxu0 0.0
    %1652 = vmatprep.subr.mxu0 0.0
    %1653 = vmatpush2.msra.mxu0 0.0
    %1654 = vmatprep.subr.mxu0 0.0
    %1655 = vmatpush2.msra.mxu0 0.0
    %1656 = vmatprep.subr.mxu0 0.0
    %1657 = vmatpush2.msra.mxu0 0.0
    %1658 = vmatprep.subr.mxu0 0.0
    %1659 = vmatpush2.msra.mxu0 0.0
    %1660 = vmatprep.subr.mxu0 0.0
    %1661 = vmatpush2.msra.mxu0 0.0
    %1662 = vmatprep.subr.mxu0 0.0
    %1663 = vmatpush2.msra.mxu0 0.0
    %1664 = vmatprep.subr.mxu0 0.0
    %1665 = vmatpush2.msra.mxu0 0.0
    %1666 = vmatprep.subr.mxu0 0.0
    %1667 = vmatpush2.msra.mxu0 0.0
    %1668 = vmatprep.subr.mxu0 0.0
    %1669 = vmatpush2.msra.mxu0 0.0
    %1670 = vmatprep.subr.mxu0 0.0
    %1671 = vmatpush2.msra.mxu0 0.0
    %1672 = vmatprep.subr.mxu0 0.0
    %1673 = vmatpush2.msra.mxu0 0.0
    %1674 = vmatprep.subr.mxu0 0.0
    %1675 = vmatpush2.msra.mxu0 0.0
    %1676 = vmatprep.subr.mxu0 0.0
    %1677 = vmatpush2.msra.mxu0 0.0
    %1678 = vmatprep.subr.mxu0 0.0
    %1679 = vmatpush2.msra.mxu0 0.0
    %1680 = vmatprep.subr.mxu0 0.0
    %1681 = vmatpush2.msra.mxu0 0.0
    %1682 = vmatprep.mubr.f32.mxu0 0.0
    %1683 = vmatmul.mubr.f32.gmra.mxu0 %v1614
    %v1684 = vpop.f32.mrf.mxu0
    %v1685 = vadd.f32 0.0, %v1684
    %v1686 = vpop.f32.mrf.mxu0
    %1687 = vdwg.mxu0
    %v1688 = vld [vmem:[%s6] sm:$0xff]
    %v1689 = vld [vmem:[%s6 + $0x8] sm:$0xff]
    %v1690 = vld [vmem:[%s6 + $0x10] sm:$0xff]
    %v1691 = vld [vmem:[%s6 + $0x18] sm:$0xff]
    %v1692 = vld [vmem:[%s7] sm:$0xff]
    %v1693 = vld [vmem:[%s7 + $0x8] sm:$0xff]
    %v1694 = vld [vmem:[%s7 + $0x10] sm:$0xff]
    %v1695 = vld [vmem:[%s7 + $0x18] sm:$0xff]
    %v1697 = vsel %vm46, %v1610, 0
    %v1700 = vsel %vm46, %v1685, 0
    %1702 = vmatprep.subr.mxu0 0.0
    %1703 = vmatpush1.msra.mxu0 0.0
    %1704 = vmatprep.subr.mxu0 0.0
    %1705 = vmatpush1.msra.mxu0 0.0
    %1706 = vmatprep.subr.mxu0 0.0
    %1707 = vmatpush1.msra.mxu0 0.0
    %1708 = vmatprep.subr.mxu0 0.0
    %1709 = vmatpush1.msra.mxu0 0.0
    %1710 = vmatprep.subr.mxu0 0.0
    %1711 = vmatpush1.msra.mxu0 0.0
    %1712 = vmatprep.subr.mxu0 0.0
    %1713 = vmatpush1.msra.mxu0 0.0
    %1714 = vmatprep.subr.mxu0 0.0
    %1715 = vmatpush1.msra.mxu0 0.0
    %1716 = vmatprep.subr.mxu0 0.0
    %1717 = vmatpush1.msra.mxu0 0.0
    %1718 = vmatprep.subr.mxu0 0.0
    %1719 = vmatpush1.msra.mxu0 0.0
    %1720 = vmatprep.subr.mxu0 0.0
    %1721 = vmatpush1.msra.mxu0 0.0
    %1722 = vmatprep.subr.mxu0 0.0
    %1723 = vmatpush1.msra.mxu0 0.0
    %1724 = vmatprep.subr.mxu0 0.0
    %1725 = vmatpush1.msra.mxu0 0.0
    %1726 = vmatprep.subr.mxu0 0.0
    %1727 = vmatpush1.msra.mxu0 %v1695
    %1728 = vmatprep.subr.mxu0 0.0
    %1729 = vmatpush1.msra.mxu0 %v1694
    %1730 = vmatprep.subr.mxu0 0.0
    %1731 = vmatpush1.msra.mxu0 %v1693
    %1732 = vmatprep.subr.mxu0 0.0
    %1733 = vmatpush1.msra.mxu0 %v1692
    %1734 = vmatprep.subr.mxu0 0.0
    %1735 = vmatpush2.msra.mxu0 0.0
    %1736 = vmatprep.subr.mxu0 0.0
    %1737 = vmatpush2.msra.mxu0 0.0
    %1738 = vmatprep.subr.mxu0 0.0
    %1739 = vmatpush2.msra.mxu0 0.0
    %1740 = vmatprep.subr.mxu0 0.0
    %1741 = vmatpush2.msra.mxu0 0.0
    %1742 = vmatprep.subr.mxu0 0.0
    %1743 = vmatpush2.msra.mxu0 0.0
    %1744 = vmatprep.subr.mxu0 0.0
    %1745 = vmatpush2.msra.mxu0 0.0
    %1746 = vmatprep.subr.mxu0 0.0
    %1747 = vmatpush2.msra.mxu0 0.0
    %1748 = vmatprep.subr.mxu0 0.0
    %1749 = vmatpush2.msra.mxu0 0.0
    %1750 = vmatprep.subr.mxu0 0.0
    %1751 = vmatpush2.msra.mxu0 0.0
    %1752 = vmatprep.subr.mxu0 0.0
    %1753 = vmatpush2.msra.mxu0 0.0
    %1754 = vmatprep.subr.mxu0 0.0
    %1755 = vmatpush2.msra.mxu0 0.0
    %1756 = vmatprep.subr.mxu0 0.0
    %1757 = vmatpush2.msra.mxu0 0.0
    %1758 = vmatprep.subr.mxu0 0.0
    %1759 = vmatpush2.msra.mxu0 0.0
    %1760 = vmatprep.subr.mxu0 0.0
    %1761 = vmatpush2.msra.mxu0 0.0
    %1762 = vmatprep.subr.mxu0 0.0
    %1763 = vmatpush2.msra.mxu0 0.0
    %1764 = vmatprep.subr.mxu0 0.0
    %1765 = vmatpush2.msra.mxu0 0.0
    %1766 = vmatprep.mubr.f32.mxu0 0.0
    %1767 = vmatmul.mubr.f32.gmra.mxu0 %v1697
    %v1768 = vpop.f32.mrf.mxu0
    %v1769 = vadd.f32 0.0, %v1768
    %v1770 = vpop.f32.mrf.mxu0
    %1771 = vmatprep.mubr.f32.mxu0 0.0
    %1772 = vmatmul.mubr.f32.gmra.mxu0 %v1700
    %v1773 = vpop.f32.mrf.mxu0
    %v1774 = vadd.f32 0.0, %v1773
    %v1775 = vpop.f32.mrf.mxu0
    %1776 = vdwg.mxu0
    %1777 = vmatprep.subr.mxu0 0.0
    %1778 = vmatpush1.msra.mxu0 0.0
    %1779 = vmatprep.subr.mxu0 0.0
    %1780 = vmatpush1.msra.mxu0 0.0
    %1781 = vmatprep.subr.mxu0 0.0
    %1782 = vmatpush1.msra.mxu0 0.0
    %1783 = vmatprep.subr.mxu0 0.0
    %1784 = vmatpush1.msra.mxu0 0.0
    %1785 = vmatprep.subr.mxu0 0.0
    %1786 = vmatpush1.msra.mxu0 0.0
    %1787 = vmatprep.subr.mxu0 0.0
    %1788 = vmatpush1.msra.mxu0 0.0
    %1789 = vmatprep.subr.mxu0 0.0
    %1790 = vmatpush1.msra.mxu0 0.0
    %1791 = vmatprep.subr.mxu0 0.0
    %1792 = vmatpush1.msra.mxu0 0.0
    %1793 = vmatprep.subr.mxu0 0.0
    %1794 = vmatpush1.msra.mxu0 0.0
    %1795 = vmatprep.subr.mxu0 0.0
    %1796 = vmatpush1.msra.mxu0 0.0
    %1797 = vmatprep.subr.mxu0 0.0
    %1798 = vmatpush1.msra.mxu0 0.0
    %1799 = vmatprep.subr.mxu0 0.0
    %1800 = vmatpush1.msra.mxu0 0.0
    %1801 = vmatprep.subr.mxu0 0.0
    %1802 = vmatpush1.msra.mxu0 %v1691
    %1803 = vmatprep.subr.mxu0 0.0
    %1804 = vmatpush1.msra.mxu0 %v1690
    %1805 = vmatprep.subr.mxu0 0.0
    %1806 = vmatpush1.msra.mxu0 %v1689
    %1807 = vmatprep.subr.mxu0 0.0
    %1808 = vmatpush1.msra.mxu0 %v1688
    %1809 = vmatprep.subr.mxu0 0.0
    %1810 = vmatpush2.msra.mxu0 0.0
    %1811 = vmatprep.subr.mxu0 0.0
    %1812 = vmatpush2.msra.mxu0 0.0
    %1813 = vmatprep.subr.mxu0 0.0
    %1814 = vmatpush2.msra.mxu0 0.0
    %1815 = vmatprep.subr.mxu0 0.0
    %1816 = vmatpush2.msra.mxu0 0.0
    %1817 = vmatprep.subr.mxu0 0.0
    %1818 = vmatpush2.msra.mxu0 0.0
    %1819 = vmatprep.subr.mxu0 0.0
    %1820 = vmatpush2.msra.mxu0 0.0
    %1821 = vmatprep.subr.mxu0 0.0
    %1822 = vmatpush2.msra.mxu0 0.0
    %1823 = vmatprep.subr.mxu0 0.0
    %1824 = vmatpush2.msra.mxu0 0.0
    %1825 = vmatprep.subr.mxu0 0.0
    %1826 = vmatpush2.msra.mxu0 0.0
    %1827 = vmatprep.subr.mxu0 0.0
    %1828 = vmatpush2.msra.mxu0 0.0
    %1829 = vmatprep.subr.mxu0 0.0
    %1830 = vmatpush2.msra.mxu0 0.0
    %1831 = vmatprep.subr.mxu0 0.0
    %1832 = vmatpush2.msra.mxu0 0.0
    %1833 = vmatprep.subr.mxu0 0.0
    %1834 = vmatpush2.msra.mxu0 0.0
    %1835 = vmatprep.subr.mxu0 0.0
    %1836 = vmatpush2.msra.mxu0 0.0
    %1837 = vmatprep.subr.mxu0 0.0
    %1838 = vmatpush2.msra.mxu0 0.0
    %1839 = vmatprep.subr.mxu0 0.0
    %1840 = vmatpush2.msra.mxu0 0.0
    %1841 = vmatprep.mubr.f32.mxu0 0.0
    %1842 = vmatmul.mubr.f32.gmra.mxu0 %v1320
    %v1843 = vpop.f32.mrf.mxu0
    %v1844 = vadd.f32 %v1769, %v1843
    %v1845 = vpop.f32.mrf.mxu0
    %1846 = vmatprep.mubr.f32.mxu0 0.0
    %1847 = vmatmul.mubr.f32.gmra.mxu0 %v1419
    %v1848 = vpop.f32.mrf.mxu0
    %v1849 = vadd.f32 %v1774, %v1848
    %v1850 = vpop.f32.mrf.mxu0
    %1851 = vdwg.mxu0
    %v1852 = vld [vmem:[%s8] sm:$0x1]
    %v1854 = vlaneseq
    %v1855 = vshrl.u32 %v1854, 7
    %v1856 = vsub.s32 0, %v1855
    %v1857 = vrot.slane %v1852, %v1856
    %v1859 = vadd.f32 %v1844, %v1857
    %v1860 = vadd.f32 %v1849, %v1857
    %1861 = vst.msk [vmem:[#allocation2] sm:$0xff] %vm46, %v1859
    %1862 = vst.msk [vmem:[#allocation2 + $0x8] sm:$0xff] %vm46, %v1860
    // Predicated region
    $region38: #{tpu_custom_call.1} parent=1 // pred_check
      _
    $region39: #{tpu_custom_call.1} parent=1 // pred_check_branch
      %1864 = sbr.rel (0) target = $region41
    $region40: #{tpu_custom_call.1} parent=1 // pred_region
      %s1866 = ssub.s32 256, 256
      %1867 = vsyncadd [#allocation3], %s1866
      %s1868 = sshll.u32 [#allocation2], 4
      %s1869 = int_to_ptr.vmem [resolvable:$true] %s1868
      %1874 = dma.vmem_to_hbm [thread:$0]  %s1869, 256, %s9, [#allocation3], 128, 128, 8
    $region41: #{tpu_custom_call.1} parent=1 // pred_fallthru
      _
    // Predicated region
    $region42: #{tpu_custom_call.1} parent=1 // pred_check
      _
    $region43: #{tpu_custom_call.1} parent=1 // pred_check_branch
      %1876 = sbr.rel (0) target = $region45
    $region44: #{tpu_custom_call.1} parent=1 // pred_region
      %1877 = dma.done [#allocation3], 256
    $region45: #{tpu_custom_call.1} parent=1 // pred_fallthru
      _
    %1878 = vsyncpa [#allocation3], 1

</llo_original>
